<compile_context>
chip_gen: v5e
topology: v5e:2x2
jax: 0.10.0
libtpu: 0.0.40
codegen_flags: <defaults>
</compile_context>

<pallas_src>
import jax
import jax.numpy as jnp
from jax.experimental import pallas as pl
from jax.experimental.pallas import tpu as pltpu


def _vmem_spec():
    # whole-array resident in VMEM (all arrays are small; padded dims are 128-aligned)
    return pl.BlockSpec(memory_space=pltpu.MemorySpace.VMEM)


# ---------------------------------------------------------------------------
# Fused kernel: 3 x SGCNConv  ->  global_mean_pool  ->  Linear  ->  log_softmax(dim=0)
# ---------------------------------------------------------------------------
def sgcn_fused_kernel(x_ref, pos_ref, gsrc_ref, gdiff_ref, gdstT_ref, rep_ref,
                      pool_ref, w1s_ref, b1s_ref, w2s_ref, b2s_ref,
                      wl_ref, bl_ref, out_ref):
    # 0/+-1 matrices are stored bf16 (exact); upcast ONCE (hoisted out of the layer loop)
    # so every dot below is a pure-f32 MXU matmul.
    gsrc = gsrc_ref[...].astype(jnp.float32)     # [E, N]  one-hot of edge sources (j)
    gdiff = gdiff_ref[...].astype(jnp.float32)   # [E, N]  onehot(src) - onehot(dst)
    gdstT = gdstT_ref[...].astype(jnp.float32)   # [N, E]  transposed one-hot of edge targets (i)
    rep = rep_ref[...].astype(jnp.float32)       # [F, H1] interleaved column-repeat
    pos = pos_ref[...]                           # [N, coors]
    h = x_ref[...]                               # [N, F]

    num_layers = w1s_ref.shape[0]
    for l in range(num_layers):                  # unrolled; weights indexed statically
        w1 = w1s_ref[l]                          # [coors, H1]
        b1 = b1s_ref[l]                          # [1, H1]
        w2 = w2s_ref[l]                          # [H1, F]
        b2 = b2s_ref[l]                          # [1, F]

        # lin_in hoisted through the gather:
        #   relu(lin_in(pos_j - pos_i)) == relu(gdiff @ (pos @ w1) + b1)
        p_nodes = jnp.dot(pos, w1, preferred_element_type=jnp.float32)              # [N, H1]
        s = jnp.maximum(
            jnp.dot(gdiff, p_nodes, preferred_element_type=jnp.float32) + b1, 0.0)  # [E, H1]

        # per-channel replication on nodes first, then a lane-dense (width H1) gather
        xr = jnp.dot(h, rep, preferred_element_type=jnp.float32)                    # [N, H1]
        x_rep = jnp.dot(gsrc, xr, preferred_element_type=jnp.float32)               # [E, H1]

        msg = s * x_rep                                                              # [E, H1]

        # scatter-add over destination nodes == plain matmul with the pre-transposed one-hot
        agg = jnp.dot(gdstT, msg, preferred_element_type=jnp.float32)                # [N, H1]

        # dropout(p=0.3) is identity at inference time
        h = jnp.dot(agg, w2, preferred_element_type=jnp.float32) + b2                # [N, F]

    # global_mean_pool + final Linear + log_softmax over dim=0 (across graphs, as in the reference)
    pooled = jnp.dot(pool_ref[...], h, preferred_element_type=jnp.float32)            # [G, F]
    logits = (jnp.dot(pooled, wl_ref[...], preferred_element_type=jnp.float32)
              + bl_ref[...])                                                          # [G, C]
    m = jnp.max(logits, axis=0, keepdims=True)
    z = logits - m
    lse = jnp.log(jnp.sum(jnp.exp(z), axis=0, keepdims=True))
    out_ref[...] = z - lse


@jax.jit
def sgcn_forward(x, pos, gsrc, gdiff, gdstT, rep, pool, w1s, b1s, w2s, b2s, wl, bl):
    g = pool.shape[0]
    c = wl.shape[1]
    return pl.pallas_call(
        sgcn_fused_kernel,
        out_shape=jax.ShapeDtypeStruct((g, c), jnp.float32),
        in_specs=[_vmem_spec()] * 13,
        out_specs=_vmem_spec(),
    )(x, pos, gsrc, gdiff, gdstT, rep, pool, w1s, b1s, w2s, b2s, wl, bl)


# ---------------------------------------------------------------------------
# Pure-JAX reference (unpadded), mirrors the PyTorch module exactly
# ---------------------------------------------------------------------------
def reference_forward(x, pos, src, dst, batch, convs, wl, bl, num_graphs):
    n, f = x.shape
    h1 = convs[0][0].shape[1]
    hid = h1 // f
    h = x
    for (w1, b1, w2, b2) in convs:
        rel = pos[src] - pos[dst]
        s = jnp.maximum(rel @ w1 + b1, 0.0)                                   # [E, H1]
        x_j = h[src]                                                           # [E, F]
        msg = (s.reshape(-1, f, hid) * x_j[:, :, None]).reshape(-1, h1)        # [E, H1]
        agg = jnp.zeros((n, h1), jnp.float32).at[dst].add(msg)                 # [N, H1]
        h = agg @ w2 + b2                                                      # [N, F]
    memb = (batch[None, :] == jnp.arange(num_graphs)[:, None]).astype(jnp.float32)
    pooled = (memb / jnp.sum(memb, axis=1, keepdims=True)) @ h
    logits = pooled @ wl + bl
    return jax.nn.log_softmax(logits, axis=0)


def _linear_init(key, fan_in, fan_out):
    k1, k2 = jax.random.split(key)
    bound = 1.0 / float(fan_in) ** 0.5
    w = jax.random.uniform(k1, (fan_in, fan_out), jnp.float32, -bound, bound)
    b = jax.random.uniform(k2, (1, fan_out), jnp.float32, -bound, bound)
    return w, b


if __name__ == "__main__":
    key = jax.random.PRNGKey(0)

    num_classes = 4
    num_graphs = 2
    nodes_per_graph = 16
    N = num_graphs * nodes_per_graph
    F = 16            # node feature dim = out_features (layers chain)
    COORS = 2
    H1 = 64           # out_channels_1
    HID = H1 // F     # hidden slots per input channel

    # MXU/vreg-aligned padded sizes (zero padding is an exact no-op, see kernel header)
    N_PAD = 128
    E_PAD = 128

    ks = jax.random.split(key, 10)

    # ---- graph data (deterministic) ----
    x = jax.random.normal(ks[0], (N, F), jnp.float32)
    pos = jax.random.normal(ks[1], (N, COORS), jnp.float32)
    batch = jnp.repeat(jnp.arange(num_graphs), nodes_per_graph)

    # bidirectional ring inside each graph
    base = jnp.arange(nodes_per_graph)
    src_parts, dst_parts = [], []
    for g in range(num_graphs):
        off = g * nodes_per_graph
        s = base + off
        d = (base + 1) % nodes_per_graph + off
        src_parts += [s, d]
        dst_parts += [d, s]
    src = jnp.concatenate(src_parts)   # edge_index[0]  (j, message source)
    dst = jnp.concatenate(dst_parts)   # edge_index[1]  (i, aggregation target)
    E = int(src.shape[0])
    assert E <= E_PAD and N <= N_PAD

    # padded node arrays
    x_pad = jnp.zeros((N_PAD, F), jnp.float32).at[:N].set(x)
    pos_pad = jnp.zeros((N_PAD, COORS), jnp.float32).at[:N].set(pos)

    # padded one-hot gather/scatter matrices (bf16: exact for 0/+-1, halves HBM/VMEM traffic).
    # gdstT is pre-transposed in the wrapper so the in-kernel scatter-add is a plain matmul.
    gsrc_f = jnp.zeros((E_PAD, N_PAD), jnp.float32).at[jnp.arange(E), src].set(1.0)
    gdst_f = jnp.zeros((E_PAD, N_PAD), jnp.float32).at[jnp.arange(E), dst].set(1.0)
    gdiff_f = gsrc_f - gdst_f
    gsrc_bf = gsrc_f.astype(jnp.bfloat16)
    gdiff_bf = gdiff_f.astype(jnp.bfloat16)
    gdstT_bf = gdst_f.T.astype(jnp.bfloat16)

    # interleaved column-repeat matrix: (h @ rep)[:, f*HID + k] = h[:, f]
    rep = jnp.zeros((F, H1), jnp.float32)
    rows = jnp.arange(F)[:, None]
    cols = jnp.arange(F)[:, None] * HID + jnp.arange(HID)[None, :]
    rep = rep.at[rows, cols].set(1.0)
    rep_bf = rep.astype(jnp.bfloat16)

    # global_mean_pool matrix (padded node columns are zero-weighted)
    memb = (batch[None, :] == jnp.arange(num_graphs)[:, None]).astype(jnp.float32)
    pool_real = memb / jnp.sum(memb, axis=1, keepdims=True)            # [G, N]
    pool = jnp.zeros((num_graphs, N_PAD), jnp.float32).at[:, :N].set(pool_real)

    # ---- deterministic parameters (PyTorch-style uniform init), stacked per layer ----
    convs = []
    for i in range(3):
        w1, b1 = _linear_init(ks[2 + 2 * i], COORS, H1)      # lin_in:  2  -> 64
        w2, b2 = _linear_init(ks[3 + 2 * i], H1, F)          # lin_out: 64 -> 16
        convs.append((w1, b1, w2, b2))
    wl, bl = _linear_init(ks[8], F, num_classes)             # linear:  16 -> num_classes

    w1s = jnp.stack([c[0] for c in convs])   # [3, 2, 64]
    b1s = jnp.stack([c[1] for c in convs])   # [3, 1, 64]
    w2s = jnp.stack([c[2] for c in convs])   # [3, 64, 16]
    b2s = jnp.stack([c[3] for c in convs])   # [3, 1, 16]

    out = sgcn_forward(x_pad, pos_pad, gsrc_bf, gdiff_bf, gdstT_bf, rep_bf, pool,
                       w1s, b1s, w2s, b2s, wl, bl)
    jax.block_until_ready(out)
    assert out.shape == (num_graphs, num_classes)

    ref = reference_forward(x, pos, src, dst, batch, convs, wl, bl, num_graphs)
    assert jnp.allclose(out, ref, rtol=1e-4, atol=1e-4), (out, ref)

    print("KERNEL_OK")
</pallas_src>

<mosaic_0001>
module attributes {stable_mosaic.version = 11 : i64} {
  func.func @sgcn_fused_kernel(%arg0: memref<128x16xf32, #tpu.memory_space<vmem>>, %arg1: memref<128x2xf32, #tpu.memory_space<vmem>>, %arg2: memref<128x128xbf16, #tpu.memory_space<vmem>>, %arg3: memref<128x128xbf16, #tpu.memory_space<vmem>>, %arg4: memref<128x128xbf16, #tpu.memory_space<vmem>>, %arg5: memref<16x64xbf16, #tpu.memory_space<vmem>>, %arg6: memref<2x128xf32, #tpu.memory_space<vmem>>, %arg7: memref<3x2x64xf32, #tpu.memory_space<vmem>>, %arg8: memref<3x1x64xf32, #tpu.memory_space<vmem>>, %arg9: memref<3x64x16xf32, #tpu.memory_space<vmem>>, %arg10: memref<3x1x16xf32, #tpu.memory_space<vmem>>, %arg11: memref<16x4xf32, #tpu.memory_space<vmem>>, %arg12: memref<1x4xf32, #tpu.memory_space<vmem>>, %arg13: memref<2x4xf32, #tpu.memory_space<vmem>>) attributes {dimension_semantics = [], scalar_prefetch = 0 : i64, scratch_operands = 0 : i64, tpu.core_type = #tpu.core_type<tc>} {
    %c0 = arith.constant 0 : index
    %c0_0 = arith.constant 0 : index
    %0 = vector.load %arg2[%c0, %c0_0] : memref<128x128xbf16, #tpu.memory_space<vmem>>, vector<128x128xbf16>
    %1 = arith.extf %0 : vector<128x128xbf16> to vector<128x128xf32>
    %c0_1 = arith.constant 0 : index
    %c0_2 = arith.constant 0 : index
    %2 = vector.load %arg3[%c0_1, %c0_2] : memref<128x128xbf16, #tpu.memory_space<vmem>>, vector<128x128xbf16>
    %3 = arith.extf %2 : vector<128x128xbf16> to vector<128x128xf32>
    %c0_3 = arith.constant 0 : index
    %c0_4 = arith.constant 0 : index
    %4 = vector.load %arg4[%c0_3, %c0_4] : memref<128x128xbf16, #tpu.memory_space<vmem>>, vector<128x128xbf16>
    %5 = arith.extf %4 : vector<128x128xbf16> to vector<128x128xf32>
    %c0_5 = arith.constant 0 : index
    %c0_6 = arith.constant 0 : index
    %6 = vector.load %arg5[%c0_5, %c0_6] : memref<16x64xbf16, #tpu.memory_space<vmem>>, vector<16x64xbf16>
    %7 = arith.extf %6 : vector<16x64xbf16> to vector<16x64xf32>
    %c0_7 = arith.constant 0 : index
    %c0_8 = arith.constant 0 : index
    %8 = vector.load %arg1[%c0_7, %c0_8] : memref<128x2xf32, #tpu.memory_space<vmem>>, vector<128x2xf32>
    %c0_9 = arith.constant 0 : index
    %c0_10 = arith.constant 0 : index
    %9 = vector.load %arg0[%c0_9, %c0_10] : memref<128x16xf32, #tpu.memory_space<vmem>>, vector<128x16xf32>
    %c0_11 = arith.constant 0 : index
    %c0_12 = arith.constant 0 : index
    %c0_13 = arith.constant 0 : index
    %10 = vector.load %arg7[%c0_11, %c0_12, %c0_13] : memref<3x2x64xf32, #tpu.memory_space<vmem>>, vector<1x2x64xf32>
    %11 = vector.shape_cast %10 : vector<1x2x64xf32> to vector<2x64xf32>
    %c0_14 = arith.constant 0 : index
    %c0_15 = arith.constant 0 : index
    %c0_16 = arith.constant 0 : index
    %12 = vector.load %arg8[%c0_14, %c0_15, %c0_16] : memref<3x1x64xf32, #tpu.memory_space<vmem>>, vector<1x1x64xf32>
    %13 = vector.shape_cast %12 : vector<1x1x64xf32> to vector<1x64xf32>
    %c0_17 = arith.constant 0 : index
    %c0_18 = arith.constant 0 : index
    %c0_19 = arith.constant 0 : index
    %14 = vector.load %arg9[%c0_17, %c0_18, %c0_19] : memref<3x64x16xf32, #tpu.memory_space<vmem>>, vector<1x64x16xf32>
    %15 = vector.shape_cast %14 : vector<1x64x16xf32> to vector<64x16xf32>
    %c0_20 = arith.constant 0 : index
    %c0_21 = arith.constant 0 : index
    %c0_22 = arith.constant 0 : index
    %16 = vector.load %arg10[%c0_20, %c0_21, %c0_22] : memref<3x1x16xf32, #tpu.memory_space<vmem>>, vector<1x1x16xf32>
    %17 = vector.shape_cast %16 : vector<1x1x16xf32> to vector<1x16xf32>
    %cst = arith.constant dense<0.000000e+00> : vector<128x64xf32>
    %18 = tpu.matmul %8, %11, %cst {dimension_numbers = #tpu.dot_dimension_numbers<[1], [0], [0], [1], [0, 0, 1, 1], [], []>} : vector<128x2xf32>, vector<2x64xf32>, vector<128x64xf32> -> vector<128x64xf32>
    %cst_23 = arith.constant dense<0.000000e+00> : vector<128x64xf32>
    %19 = tpu.matmul %3, %18, %cst_23 {dimension_numbers = #tpu.dot_dimension_numbers<[1], [0], [0], [1], [0, 0, 1, 1], [], []>} : vector<128x128xf32>, vector<128x64xf32>, vector<128x64xf32> -> vector<128x64xf32>
    %20 = vector.broadcast %13 : vector<1x64xf32> to vector<128x64xf32>
    %21 = arith.addf %19, %20 : vector<128x64xf32>
    %cst_24 = arith.constant 0.000000e+00 : f32
    %22 = vector.broadcast %cst_24 : f32 to vector<128x64xf32>
    %23 = arith.maximumf %21, %22 : vector<128x64xf32>
    %cst_25 = arith.constant dense<0.000000e+00> : vector<128x64xf32>
    %24 = tpu.matmul %9, %7, %cst_25 {dimension_numbers = #tpu.dot_dimension_numbers<[1], [0], [0], [1], [0, 0, 1, 1], [], []>} : vector<128x16xf32>, vector<16x64xf32>, vector<128x64xf32> -> vector<128x64xf32>
    %cst_26 = arith.constant dense<0.000000e+00> : vector<128x64xf32>
    %25 = tpu.matmul %1, %24, %cst_26 {dimension_numbers = #tpu.dot_dimension_numbers<[1], [0], [0], [1], [0, 0, 1, 1], [], []>} : vector<128x128xf32>, vector<128x64xf32>, vector<128x64xf32> -> vector<128x64xf32>
    %26 = arith.mulf %23, %25 : vector<128x64xf32>
    %cst_27 = arith.constant dense<0.000000e+00> : vector<128x64xf32>
    %27 = tpu.matmul %5, %26, %cst_27 {dimension_numbers = #tpu.dot_dimension_numbers<[1], [0], [0], [1], [0, 0, 1, 1], [], []>} : vector<128x128xf32>, vector<128x64xf32>, vector<128x64xf32> -> vector<128x64xf32>
    %cst_28 = arith.constant dense<0.000000e+00> : vector<128x16xf32>
    %28 = tpu.matmul %27, %15, %cst_28 {dimension_numbers = #tpu.dot_dimension_numbers<[1], [0], [0], [1], [0, 0, 1, 1], [], []>} : vector<128x64xf32>, vector<64x16xf32>, vector<128x16xf32> -> vector<128x16xf32>
    %29 = vector.broadcast %17 : vector<1x16xf32> to vector<128x16xf32>
    %30 = arith.addf %28, %29 : vector<128x16xf32>
    %c1 = arith.constant 1 : index
    %c0_29 = arith.constant 0 : index
    %c0_30 = arith.constant 0 : index
    %31 = vector.load %arg7[%c1, %c0_29, %c0_30] : memref<3x2x64xf32, #tpu.memory_space<vmem>>, vector<1x2x64xf32>
    %32 = vector.shape_cast %31 : vector<1x2x64xf32> to vector<2x64xf32>
    %c1_31 = arith.constant 1 : index
    %c0_32 = arith.constant 0 : index
    %c0_33 = arith.constant 0 : index
    %33 = vector.load %arg8[%c1_31, %c0_32, %c0_33] : memref<3x1x64xf32, #tpu.memory_space<vmem>>, vector<1x1x64xf32>
    %34 = vector.shape_cast %33 : vector<1x1x64xf32> to vector<1x64xf32>
    %c1_34 = arith.constant 1 : index
    %c0_35 = arith.constant 0 : index
    %c0_36 = arith.constant 0 : index
    %35 = vector.load %arg9[%c1_34, %c0_35, %c0_36] : memref<3x64x16xf32, #tpu.memory_space<vmem>>, vector<1x64x16xf32>
    %36 = vector.shape_cast %35 : vector<1x64x16xf32> to vector<64x16xf32>
    %c1_37 = arith.constant 1 : index
    %c0_38 = arith.constant 0 : index
    %c0_39 = arith.constant 0 : index
    %37 = vector.load %arg10[%c1_37, %c0_38, %c0_39] : memref<3x1x16xf32, #tpu.memory_space<vmem>>, vector<1x1x16xf32>
    %38 = vector.shape_cast %37 : vector<1x1x16xf32> to vector<1x16xf32>
    %cst_40 = arith.constant dense<0.000000e+00> : vector<128x64xf32>
    %39 = tpu.matmul %8, %32, %cst_40 {dimension_numbers = #tpu.dot_dimension_numbers<[1], [0], [0], [1], [0, 0, 1, 1], [], []>} : vector<128x2xf32>, vector<2x64xf32>, vector<128x64xf32> -> vector<128x64xf32>
    %cst_41 = arith.constant dense<0.000000e+00> : vector<128x64xf32>
    %40 = tpu.matmul %3, %39, %cst_41 {dimension_numbers = #tpu.dot_dimension_numbers<[1], [0], [0], [1], [0, 0, 1, 1], [], []>} : vector<128x128xf32>, vector<128x64xf32>, vector<128x64xf32> -> vector<128x64xf32>
    %41 = vector.broadcast %34 : vector<1x64xf32> to vector<128x64xf32>
    %42 = arith.addf %40, %41 : vector<128x64xf32>
    %cst_42 = arith.constant 0.000000e+00 : f32
    %43 = vector.broadcast %cst_42 : f32 to vector<128x64xf32>
    %44 = arith.maximumf %42, %43 : vector<128x64xf32>
    %cst_43 = arith.constant dense<0.000000e+00> : vector<128x64xf32>
    %45 = tpu.matmul %30, %7, %cst_43 {dimension_numbers = #tpu.dot_dimension_numbers<[1], [0], [0], [1], [0, 0, 1, 1], [], []>} : vector<128x16xf32>, vector<16x64xf32>, vector<128x64xf32> -> vector<128x64xf32>
    %cst_44 = arith.constant dense<0.000000e+00> : vector<128x64xf32>
    %46 = tpu.matmul %1, %45, %cst_44 {dimension_numbers = #tpu.dot_dimension_numbers<[1], [0], [0], [1], [0, 0, 1, 1], [], []>} : vector<128x128xf32>, vector<128x64xf32>, vector<128x64xf32> -> vector<128x64xf32>
    %47 = arith.mulf %44, %46 : vector<128x64xf32>
    %cst_45 = arith.constant dense<0.000000e+00> : vector<128x64xf32>
    %48 = tpu.matmul %5, %47, %cst_45 {dimension_numbers = #tpu.dot_dimension_numbers<[1], [0], [0], [1], [0, 0, 1, 1], [], []>} : vector<128x128xf32>, vector<128x64xf32>, vector<128x64xf32> -> vector<128x64xf32>
    %cst_46 = arith.constant dense<0.000000e+00> : vector<128x16xf32>
    %49 = tpu.matmul %48, %36, %cst_46 {dimension_numbers = #tpu.dot_dimension_numbers<[1], [0], [0], [1], [0, 0, 1, 1], [], []>} : vector<128x64xf32>, vector<64x16xf32>, vector<128x16xf32> -> vector<128x16xf32>
    %50 = vector.broadcast %38 : vector<1x16xf32> to vector<128x16xf32>
    %51 = arith.addf %49, %50 : vector<128x16xf32>
    %c2 = arith.constant 2 : index
    %c0_47 = arith.constant 0 : index
    %c0_48 = arith.constant 0 : index
    %52 = vector.load %arg7[%c2, %c0_47, %c0_48] : memref<3x2x64xf32, #tpu.memory_space<vmem>>, vector<1x2x64xf32>
    %53 = vector.shape_cast %52 : vector<1x2x64xf32> to vector<2x64xf32>
    %c2_49 = arith.constant 2 : index
    %c0_50 = arith.constant 0 : index
    %c0_51 = arith.constant 0 : index
    %54 = vector.load %arg8[%c2_49, %c0_50, %c0_51] : memref<3x1x64xf32, #tpu.memory_space<vmem>>, vector<1x1x64xf32>
    %55 = vector.shape_cast %54 : vector<1x1x64xf32> to vector<1x64xf32>
    %c2_52 = arith.constant 2 : index
    %c0_53 = arith.constant 0 : index
    %c0_54 = arith.constant 0 : index
    %56 = vector.load %arg9[%c2_52, %c0_53, %c0_54] : memref<3x64x16xf32, #tpu.memory_space<vmem>>, vector<1x64x16xf32>
    %57 = vector.shape_cast %56 : vector<1x64x16xf32> to vector<64x16xf32>
    %c2_55 = arith.constant 2 : index
    %c0_56 = arith.constant 0 : index
    %c0_57 = arith.constant 0 : index
    %58 = vector.load %arg10[%c2_55, %c0_56, %c0_57] : memref<3x1x16xf32, #tpu.memory_space<vmem>>, vector<1x1x16xf32>
    %59 = vector.shape_cast %58 : vector<1x1x16xf32> to vector<1x16xf32>
    %cst_58 = arith.constant dense<0.000000e+00> : vector<128x64xf32>
    %60 = tpu.matmul %8, %53, %cst_58 {dimension_numbers = #tpu.dot_dimension_numbers<[1], [0], [0], [1], [0, 0, 1, 1], [], []>} : vector<128x2xf32>, vector<2x64xf32>, vector<128x64xf32> -> vector<128x64xf32>
    %cst_59 = arith.constant dense<0.000000e+00> : vector<128x64xf32>
    %61 = tpu.matmul %3, %60, %cst_59 {dimension_numbers = #tpu.dot_dimension_numbers<[1], [0], [0], [1], [0, 0, 1, 1], [], []>} : vector<128x128xf32>, vector<128x64xf32>, vector<128x64xf32> -> vector<128x64xf32>
    %62 = vector.broadcast %55 : vector<1x64xf32> to vector<128x64xf32>
    %63 = arith.addf %61, %62 : vector<128x64xf32>
    %cst_60 = arith.constant 0.000000e+00 : f32
    %64 = vector.broadcast %cst_60 : f32 to vector<128x64xf32>
    %65 = arith.maximumf %63, %64 : vector<128x64xf32>
    %cst_61 = arith.constant dense<0.000000e+00> : vector<128x64xf32>
    %66 = tpu.matmul %51, %7, %cst_61 {dimension_numbers = #tpu.dot_dimension_numbers<[1], [0], [0], [1], [0, 0, 1, 1], [], []>} : vector<128x16xf32>, vector<16x64xf32>, vector<128x64xf32> -> vector<128x64xf32>
    %cst_62 = arith.constant dense<0.000000e+00> : vector<128x64xf32>
    %67 = tpu.matmul %1, %66, %cst_62 {dimension_numbers = #tpu.dot_dimension_numbers<[1], [0], [0], [1], [0, 0, 1, 1], [], []>} : vector<128x128xf32>, vector<128x64xf32>, vector<128x64xf32> -> vector<128x64xf32>
    %68 = arith.mulf %65, %67 : vector<128x64xf32>
    %cst_63 = arith.constant dense<0.000000e+00> : vector<128x64xf32>
    %69 = tpu.matmul %5, %68, %cst_63 {dimension_numbers = #tpu.dot_dimension_numbers<[1], [0], [0], [1], [0, 0, 1, 1], [], []>} : vector<128x128xf32>, vector<128x64xf32>, vector<128x64xf32> -> vector<128x64xf32>
    %cst_64 = arith.constant dense<0.000000e+00> : vector<128x16xf32>
    %70 = tpu.matmul %69, %57, %cst_64 {dimension_numbers = #tpu.dot_dimension_numbers<[1], [0], [0], [1], [0, 0, 1, 1], [], []>} : vector<128x64xf32>, vector<64x16xf32>, vector<128x16xf32> -> vector<128x16xf32>
    %71 = vector.broadcast %59 : vector<1x16xf32> to vector<128x16xf32>
    %72 = arith.addf %70, %71 : vector<128x16xf32>
    %c0_65 = arith.constant 0 : index
    %c0_66 = arith.constant 0 : index
    %73 = vector.load %arg6[%c0_65, %c0_66] : memref<2x128xf32, #tpu.memory_space<vmem>>, vector<2x128xf32>
    %cst_67 = arith.constant dense<0.000000e+00> : vector<2x16xf32>
    %74 = tpu.matmul %73, %72, %cst_67 {dimension_numbers = #tpu.dot_dimension_numbers<[1], [0], [0], [1], [0, 0, 1, 1], [], []>} : vector<2x128xf32>, vector<128x16xf32>, vector<2x16xf32> -> vector<2x16xf32>
    %c0_68 = arith.constant 0 : index
    %c0_69 = arith.constant 0 : index
    %75 = vector.load %arg11[%c0_68, %c0_69] : memref<16x4xf32, #tpu.memory_space<vmem>>, vector<16x4xf32>
    %cst_70 = arith.constant dense<0.000000e+00> : vector<2x4xf32>
    %76 = tpu.matmul %74, %75, %cst_70 {dimension_numbers = #tpu.dot_dimension_numbers<[1], [0], [0], [1], [0, 0, 1, 1], [], []>} : vector<2x16xf32>, vector<16x4xf32>, vector<2x4xf32> -> vector<2x4xf32>
    %c0_71 = arith.constant 0 : index
    %c0_72 = arith.constant 0 : index
    %77 = vector.load %arg12[%c0_71, %c0_72] : memref<1x4xf32, #tpu.memory_space<vmem>>, vector<1x4xf32>
    %78 = vector.broadcast %77 : vector<1x4xf32> to vector<2x4xf32>
    %79 = arith.addf %76, %78 : vector<2x4xf32>
    %cst_73 = arith.constant dense<0xFF800000> : vector<4xf32>
    %80 = vector.multi_reduction <maximumf>, %79, %cst_73 [0] : vector<2x4xf32> to vector<4xf32>
    %81 = vector.shape_cast %80 : vector<4xf32> to vector<1x4xf32>
    %82 = vector.broadcast %81 : vector<1x4xf32> to vector<2x4xf32>
    %83 = arith.subf %79, %82 : vector<2x4xf32>
    %84 = math.exp %83 : vector<2x4xf32>
    %cst_74 = arith.constant dense<0.000000e+00> : vector<4xf32>
    %85 = vector.multi_reduction <add>, %84, %cst_74 [0] : vector<2x4xf32> to vector<4xf32>
    %86 = vector.shape_cast %85 : vector<4xf32> to vector<1x4xf32>
    %87 = math.log %86 : vector<1x4xf32>
    %88 = vector.broadcast %87 : vector<1x4xf32> to vector<2x4xf32>
    %89 = arith.subf %83, %88 : vector<2x4xf32>
    %c0_75 = arith.constant 0 : index
    %c0_76 = arith.constant 0 : index
    %90 = vector.load %arg13[%c0_75, %c0_76] : memref<2x4xf32, #tpu.memory_space<vmem>>, vector<2x4xf32>
    tpu.vector_store %arg13[%c0_75, %c0_76], %89 {strides = array<i32>} : memref<2x4xf32, #tpu.memory_space<vmem>>, vector<2x4xf32>,
    return
  }
}

</mosaic_0001>

<llo_original>
// kernel: sgcn_forward.1
$region0: #{sgcn_forward.1}
  #allocation0 [shape = 'u32[]', space=smem, size = 0x4, offset = 0x4, fixed_abs, tag = 'smem constant byte address 0x4 - core index']
  #allocation1 [shape = 'u32[72,128]{1,0:T(1,128)}', space=vmem, size = 0x9000, scoped, tag = 'internal scratch']
  %s0 = inlined_call_operand.vmem [shape: f32[128,16], index: 0, kind: input, shape index: {}]
  %s1 = inlined_call_operand.vmem [shape: f32[128,2], index: 1, kind: input, shape index: {}]
  %s2 = inlined_call_operand.vmem [shape: bf16[128,128], index: 2, kind: input, shape index: {}]
  %s3 = inlined_call_operand.vmem [shape: bf16[128,128], index: 3, kind: input, shape index: {}]
  %s4 = inlined_call_operand.vmem [shape: bf16[128,128], index: 4, kind: input, shape index: {}]
  %s5 = inlined_call_operand.vmem [shape: bf16[16,64], index: 5, kind: input, shape index: {}]
  %s6 = inlined_call_operand.vmem [shape: f32[2,128], index: 6, kind: input, shape index: {}]
  %s7 = inlined_call_operand.vmem [shape: f32[3,2,64], index: 7, kind: input, shape index: {}]
  %s8 = inlined_call_operand.vmem [shape: f32[3,1,64], index: 8, kind: input, shape index: {}]
  %s9 = inlined_call_operand.vmem [shape: f32[3,64,16], index: 9, kind: input, shape index: {}]
  %s10 = inlined_call_operand.vmem [shape: f32[3,1,16], index: 10, kind: input, shape index: {}]
  %s11 = inlined_call_operand.vmem [shape: f32[16,4], index: 11, kind: input, shape index: {}]
  %s12 = inlined_call_operand.vmem [shape: f32[1,4], index: 12, kind: input, shape index: {}]
  %s13 = inlined_call_operand.hbm [shape: f32[2,4], index: 13, kind: output, shape index: {}]
  %s14 = sld [smem:[#allocation0]]
  $region62: #{sgcn_forward.1} parent=0
    _
  %s16 = ssub.s32 1, %s14
  %s17 = scalar_select 0, %s16, %s14
  $region1: #{sgcn_forward.1} parent=0
    #allocation2 [shape = 'u8[1024]{0}', space=vmem, size = 0x400, scoped, tag = 'output window, operand 0, single buffered']
    #allocation3 [shape = 's32[1]{0}', space=sflag, size = 0x4, scoped, tag = 'scoped memory for sgcn_forward.1']
    %18 = vsyncpa [#allocation3], 0
    // Predicated region
    $region2: #{sgcn_forward.1} parent=1 // pred_check
      _
    $region3: #{sgcn_forward.1} parent=1 // pred_check_branch
      %20 = sbr.rel (0) target = $region5
    $region4: #{sgcn_forward.1} parent=1 // pred_region
      _
    $region5: #{sgcn_forward.1} parent=1 // pred_fallthru
      _
    // Predicated region
    $region6: #{sgcn_forward.1} parent=1 // pred_check
      _
    $region7: #{sgcn_forward.1} parent=1 // pred_check_branch
      %22 = sbr.rel (0) target = $region9
    $region8: #{sgcn_forward.1} parent=1 // pred_region
      _
    $region9: #{sgcn_forward.1} parent=1 // pred_fallthru
      _
    // Predicated region
    $region10: #{sgcn_forward.1} parent=1 // pred_check
      _
    $region11: #{sgcn_forward.1} parent=1 // pred_check_branch
      %24 = sbr.rel (0) target = $region13
    $region12: #{sgcn_forward.1} parent=1 // pred_region
      _
    $region13: #{sgcn_forward.1} parent=1 // pred_fallthru
      _
    // Predicated region
    $region14: #{sgcn_forward.1} parent=1 // pred_check
      _
    $region15: #{sgcn_forward.1} parent=1 // pred_check_branch
      %26 = sbr.rel (0) target = $region17
    $region16: #{sgcn_forward.1} parent=1 // pred_region
      _
    $region17: #{sgcn_forward.1} parent=1 // pred_fallthru
      _
    // Predicated region
    $region18: #{sgcn_forward.1} parent=1 // pred_check
      _
    $region19: #{sgcn_forward.1} parent=1 // pred_check_branch
      %28 = sbr.rel (0) target = $region21
    $region20: #{sgcn_forward.1} parent=1 // pred_region
      _
    $region21: #{sgcn_forward.1} parent=1 // pred_fallthru
      _
    // Predicated region
    $region22: #{sgcn_forward.1} parent=1 // pred_check
      _
    $region23: #{sgcn_forward.1} parent=1 // pred_check_branch
      %30 = sbr.rel (0) target = $region25
    $region24: #{sgcn_forward.1} parent=1 // pred_region
      _
    $region25: #{sgcn_forward.1} parent=1 // pred_fallthru
      _
    // Predicated region
    $region26: #{sgcn_forward.1} parent=1 // pred_check
      _
    $region27: #{sgcn_forward.1} parent=1 // pred_check_branch
      %32 = sbr.rel (0) target = $region29
    $region28: #{sgcn_forward.1} parent=1 // pred_region
      _
    $region29: #{sgcn_forward.1} parent=1 // pred_fallthru
      _
    // Predicated region
    $region30: #{sgcn_forward.1} parent=1 // pred_check
      _
    $region31: #{sgcn_forward.1} parent=1 // pred_check_branch
      %34 = sbr.rel (0) target = $region33
    $region32: #{sgcn_forward.1} parent=1 // pred_region
      _
    $region33: #{sgcn_forward.1} parent=1 // pred_fallthru
      _
    // Predicated region
    $region34: #{sgcn_forward.1} parent=1 // pred_check
      _
    $region35: #{sgcn_forward.1} parent=1 // pred_check_branch
      %36 = sbr.rel (0) target = $region37
    $region36: #{sgcn_forward.1} parent=1 // pred_region
      _
    $region37: #{sgcn_forward.1} parent=1 // pred_fallthru
      _
    // Predicated region
    $region38: #{sgcn_forward.1} parent=1 // pred_check
      _
    $region39: #{sgcn_forward.1} parent=1 // pred_check_branch
      %38 = sbr.rel (0) target = $region41
    $region40: #{sgcn_forward.1} parent=1 // pred_region
      _
    $region41: #{sgcn_forward.1} parent=1 // pred_fallthru
      _
    // Predicated region
    $region42: #{sgcn_forward.1} parent=1 // pred_check
      _
    $region43: #{sgcn_forward.1} parent=1 // pred_check_branch
      %40 = sbr.rel (0) target = $region45
    $region44: #{sgcn_forward.1} parent=1 // pred_region
      _
    $region45: #{sgcn_forward.1} parent=1 // pred_fallthru
      _
    // Predicated region
    $region46: #{sgcn_forward.1} parent=1 // pred_check
      _
    $region47: #{sgcn_forward.1} parent=1 // pred_check_branch
      %42 = sbr.rel (0) target = $region49
    $region48: #{sgcn_forward.1} parent=1 // pred_region
      _
    $region49: #{sgcn_forward.1} parent=1 // pred_fallthru
      _
    // Predicated region
    $region50: #{sgcn_forward.1} parent=1 // pred_check
      _
    $region51: #{sgcn_forward.1} parent=1 // pred_check_branch
      %44 = sbr.rel (0) target = $region53
    $region52: #{sgcn_forward.1} parent=1 // pred_region
      _
    $region53: #{sgcn_forward.1} parent=1 // pred_fallthru
      _
    %v45 = vld [vmem:[%s2] sm:$0xf]
    %v46 = vld [vmem:[%s2 + $0x4] sm:$0xf]
    %v47 = vld [vmem:[%s2 + $0x8] sm:$0xf]
    %v48 = vld [vmem:[%s2 + $0xc] sm:$0xf]
    %v49 = vld [vmem:[%s2 + $0x10] sm:$0xf]
    %v50 = vld [vmem:[%s2 + $0x14] sm:$0xf]
    %v51 = vld [vmem:[%s2 + $0x18] sm:$0xf]
    %v52 = vld [vmem:[%s2 + $0x1c] sm:$0xf]
    %v53 = vld [vmem:[%s2 + $0x20] sm:$0xf]
    %v54 = vld [vmem:[%s2 + $0x24] sm:$0xf]
    %v55 = vld [vmem:[%s2 + $0x28] sm:$0xf]
    %v56 = vld [vmem:[%s2 + $0x2c] sm:$0xf]
    %v57 = vld [vmem:[%s2 + $0x30] sm:$0xf]
    %v58 = vld [vmem:[%s2 + $0x34] sm:$0xf]
    %v59 = vld [vmem:[%s2 + $0x38] sm:$0xf]
    %v60 = vld [vmem:[%s2 + $0x3c] sm:$0xf]
    %v61 = vunpack.c.l.bf16 %v45
    %v62 = vunpack.c.l.bf16 %v46
    %v63 = vunpack.c.l.bf16 %v47
    %v64 = vunpack.c.l.bf16 %v48
    %v65 = vunpack.c.l.bf16 %v49
    %v66 = vunpack.c.l.bf16 %v50
    %v67 = vunpack.c.l.bf16 %v51
    %v68 = vunpack.c.l.bf16 %v52
    %v69 = vunpack.c.l.bf16 %v53
    %v70 = vunpack.c.l.bf16 %v54
    %v71 = vunpack.c.l.bf16 %v55
    %v72 = vunpack.c.l.bf16 %v56
    %v73 = vunpack.c.l.bf16 %v57
    %v74 = vunpack.c.l.bf16 %v58
    %v75 = vunpack.c.l.bf16 %v59
    %v76 = vunpack.c.l.bf16 %v60
    %v77 = vld [vmem:[%s3] sm:$0xf]
    %v78 = vld [vmem:[%s3 + $0x4] sm:$0xf]
    %v79 = vld [vmem:[%s3 + $0x8] sm:$0xf]
    %v80 = vld [vmem:[%s3 + $0xc] sm:$0xf]
    %v81 = vld [vmem:[%s3 + $0x10] sm:$0xf]
    %v82 = vld [vmem:[%s3 + $0x14] sm:$0xf]
    %v83 = vld [vmem:[%s3 + $0x18] sm:$0xf]
    %v84 = vld [vmem:[%s3 + $0x1c] sm:$0xf]
    %v85 = vld [vmem:[%s3 + $0x20] sm:$0xf]
    %v86 = vld [vmem:[%s3 + $0x24] sm:$0xf]
    %v87 = vld [vmem:[%s3 + $0x28] sm:$0xf]
    %v88 = vld [vmem:[%s3 + $0x2c] sm:$0xf]
    %v89 = vld [vmem:[%s3 + $0x30] sm:$0xf]
    %v90 = vld [vmem:[%s3 + $0x34] sm:$0xf]
    %v91 = vld [vmem:[%s3 + $0x38] sm:$0xf]
    %v92 = vld [vmem:[%s3 + $0x3c] sm:$0xf]
    %v93 = vunpack.c.l.bf16 %v77
    %v94 = vunpack.c.l.bf16 %v78
    %v95 = vunpack.c.l.bf16 %v79
    %v96 = vunpack.c.l.bf16 %v80
    %v97 = vunpack.c.l.bf16 %v81
    %v98 = vunpack.c.l.bf16 %v82
    %v99 = vunpack.c.l.bf16 %v83
    %v100 = vunpack.c.l.bf16 %v84
    %v101 = vunpack.c.l.bf16 %v85
    %v102 = vunpack.c.l.bf16 %v86
    %v103 = vunpack.c.l.bf16 %v87
    %v104 = vunpack.c.l.bf16 %v88
    %v105 = vunpack.c.l.bf16 %v89
    %v106 = vunpack.c.l.bf16 %v90
    %v107 = vunpack.c.l.bf16 %v91
    %v108 = vunpack.c.l.bf16 %v92
    %v109 = vld [vmem:[%s4] sm:$0xf]
    %v110 = vld [vmem:[%s4 + $0x4] sm:$0xf]
    %v111 = vld [vmem:[%s4 + $0x8] sm:$0xf]
    %v112 = vld [vmem:[%s4 + $0xc] sm:$0xf]
    %v113 = vld [vmem:[%s4 + $0x10] sm:$0xf]
    %v114 = vld [vmem:[%s4 + $0x14] sm:$0xf]
    %v115 = vld [vmem:[%s4 + $0x18] sm:$0xf]
    %v116 = vld [vmem:[%s4 + $0x1c] sm:$0xf]
    %v117 = vld [vmem:[%s4 + $0x20] sm:$0xf]
    %v118 = vld [vmem:[%s4 + $0x24] sm:$0xf]
    %v119 = vld [vmem:[%s4 + $0x28] sm:$0xf]
    %v120 = vld [vmem:[%s4 + $0x2c] sm:$0xf]
    %v121 = vld [vmem:[%s4 + $0x30] sm:$0xf]
    %v122 = vld [vmem:[%s4 + $0x34] sm:$0xf]
    %v123 = vld [vmem:[%s4 + $0x38] sm:$0xf]
    %v124 = vld [vmem:[%s4 + $0x3c] sm:$0xf]
    %v125 = vunpack.c.l.bf16 %v109
    %v126 = vunpack.c.l.bf16 %v110
    %v127 = vunpack.c.l.bf16 %v111
    %v128 = vunpack.c.l.bf16 %v112
    %v129 = vunpack.c.l.bf16 %v113
    %v130 = vunpack.c.l.bf16 %v114
    %v131 = vunpack.c.l.bf16 %v115
    %v132 = vunpack.c.l.bf16 %v116
    %v133 = vunpack.c.l.bf16 %v117
    %v134 = vunpack.c.l.bf16 %v118
    %v135 = vunpack.c.l.bf16 %v119
    %v136 = vunpack.c.l.bf16 %v120
    %v137 = vunpack.c.l.bf16 %v121
    %v138 = vunpack.c.l.bf16 %v122
    %v139 = vunpack.c.l.bf16 %v123
    %v140 = vunpack.c.l.bf16 %v124
    %v141 = vld [vmem:[%s5] sm:$0xf]
    %v142 = vld [vmem:[%s5 + $0x4] sm:$0xf]
    %v143 = vunpack.c.l.bf16 %v141
    %v144 = vunpack.c.l.bf16 %v142
    %v145 = vld [vmem:[%s1] sm:$0xff]
    %v146 = vld [vmem:[%s1 + $0x8] sm:$0xff]
    %v147 = vld [vmem:[%s1 + $0x10] sm:$0xff]
    %v148 = vld [vmem:[%s1 + $0x18] sm:$0xff]
    %v149 = vld [vmem:[%s1 + $0x20] sm:$0xff]
    %v150 = vld [vmem:[%s1 + $0x28] sm:$0xff]
    %v151 = vld [vmem:[%s1 + $0x30] sm:$0xff]
    %v152 = vld [vmem:[%s1 + $0x38] sm:$0xff]
    %v153 = vld [vmem:[%s1 + $0x40] sm:$0xff]
    %v154 = vld [vmem:[%s1 + $0x48] sm:$0xff]
    %v155 = vld [vmem:[%s1 + $0x50] sm:$0xff]
    %v156 = vld [vmem:[%s1 + $0x58] sm:$0xff]
    %v157 = vld [vmem:[%s1 + $0x60] sm:$0xff]
    %v158 = vld [vmem:[%s1 + $0x68] sm:$0xff]
    %v159 = vld [vmem:[%s1 + $0x70] sm:$0xff]
    %v160 = vld [vmem:[%s1 + $0x78] sm:$0xff]
    %v161 = vld [vmem:[%s0] sm:$0xff]
    %v162 = vld [vmem:[%s0 + $0x8] sm:$0xff]
    %v163 = vld [vmem:[%s0 + $0x10] sm:$0xff]
    %v164 = vld [vmem:[%s0 + $0x18] sm:$0xff]
    %v165 = vld [vmem:[%s0 + $0x20] sm:$0xff]
    %v166 = vld [vmem:[%s0 + $0x28] sm:$0xff]
    %v167 = vld [vmem:[%s0 + $0x30] sm:$0xff]
    %v168 = vld [vmem:[%s0 + $0x38] sm:$0xff]
    %v169 = vld [vmem:[%s0 + $0x40] sm:$0xff]
    %v170 = vld [vmem:[%s0 + $0x48] sm:$0xff]
    %v171 = vld [vmem:[%s0 + $0x50] sm:$0xff]
    %v172 = vld [vmem:[%s0 + $0x58] sm:$0xff]
    %v173 = vld [vmem:[%s0 + $0x60] sm:$0xff]
    %v174 = vld [vmem:[%s0 + $0x68] sm:$0xff]
    %v175 = vld [vmem:[%s0 + $0x70] sm:$0xff]
    %v176 = vld [vmem:[%s0 + $0x78] sm:$0xff]
    %v177 = vld [vmem:[%s7] sm:$0x3]
    %v178 = vld [vmem:[%s8] sm:$0x1]
    %v179 = vld [vmem:[%s9] sm:$0xff]
    %v180 = vld [vmem:[%s9 + $0x8] sm:$0xff]
    %v181 = vld [vmem:[%s9 + $0x10] sm:$0xff]
    %v182 = vld [vmem:[%s9 + $0x18] sm:$0xff]
    %v183 = vld [vmem:[%s9 + $0x20] sm:$0xff]
    %v184 = vld [vmem:[%s9 + $0x28] sm:$0xff]
    %v185 = vld [vmem:[%s9 + $0x30] sm:$0xff]
    %v186 = vld [vmem:[%s9 + $0x38] sm:$0xff]
    %v187 = vld [vmem:[%s10] sm:$0x1]
    %vm188 = vcmask 15360
    %v190 = vsel %vm188, %v145, 0
    %v193 = vsel %vm188, %v146, 0
    %v196 = vsel %vm188, %v147, 0
    %v199 = vsel %vm188, %v148, 0
    %v202 = vsel %vm188, %v149, 0
    %v205 = vsel %vm188, %v150, 0
    %v208 = vsel %vm188, %v151, 0
    %v211 = vsel %vm188, %v152, 0
    %v214 = vsel %vm188, %v153, 0
    %v217 = vsel %vm188, %v154, 0
    %v220 = vsel %vm188, %v155, 0
    %v223 = vsel %vm188, %v156, 0
    %v226 = vsel %vm188, %v157, 0
    %v229 = vsel %vm188, %v158, 0
    %v232 = vsel %vm188, %v159, 0
    %v235 = vsel %vm188, %v160, 0
    %vm237 = vcmask 1041408
    %v239 = vsel %vm237, %v177, 0
    %241 = vmatpush.msra.mxu0 0.0
    %242 = vmatpush.msra.mxu0 0.0
    %243 = vmatpush.msra.mxu0 0.0
    %244 = vmatpush.msra.mxu0 0.0
    %245 = vmatpush.msra.mxu0 0.0
    %246 = vmatpush.msra.mxu0 0.0
    %247 = vmatpush.msra.mxu0 0.0
    %248 = vmatpush.msra.mxu0 0.0
    %249 = vmatpush.msra.mxu0 0.0
    %250 = vmatpush.msra.mxu0 0.0
    %251 = vmatpush.msra.mxu0 0.0
    %252 = vmatpush.msra.mxu0 0.0
    %253 = vmatpush.msra.mxu0 0.0
    %254 = vmatpush.msra.mxu0 0.0
    %255 = vmatpush.msra.mxu0 0.0
    %256 = vmatpush.msra.mxu0 %v239
    %257 = vmatmul.f32.gmra.mxu0 %v190
    %v258 = vpop.f32.mrf.mxu0
    %v259 = vadd.f32 0.0, %v258
    %260 = vmatmul.f32.gmra.mxu0 %v193
    %v261 = vpop.f32.mrf.mxu0
    %v262 = vadd.f32 0.0, %v261
    %263 = vmatmul.f32.gmra.mxu0 %v196
    %v264 = vpop.f32.mrf.mxu0
    %v265 = vadd.f32 0.0, %v264
    %266 = vmatmul.f32.gmra.mxu0 %v199
    %v267 = vpop.f32.mrf.mxu0
    %v268 = vadd.f32 0.0, %v267
    %269 = vmatmul.f32.gmra.mxu0 %v202
    %v270 = vpop.f32.mrf.mxu0
    %v271 = vadd.f32 0.0, %v270
    %272 = vmatmul.f32.gmra.mxu0 %v205
    %v273 = vpop.f32.mrf.mxu0
    %v274 = vadd.f32 0.0, %v273
    %275 = vmatmul.f32.gmra.mxu0 %v208
    %v276 = vpop.f32.mrf.mxu0
    %v277 = vadd.f32 0.0, %v276
    %278 = vmatmul.f32.gmra.mxu0 %v211
    %v279 = vpop.f32.mrf.mxu0
    %v280 = vadd.f32 0.0, %v279
    %281 = vmatmul.f32.gmra.mxu0 %v214
    %v282 = vpop.f32.mrf.mxu0
    %v283 = vadd.f32 0.0, %v282
    %284 = vmatmul.f32.gmra.mxu0 %v217
    %v285 = vpop.f32.mrf.mxu0
    %v286 = vadd.f32 0.0, %v285
    %287 = vmatmul.f32.gmra.mxu0 %v220
    %v288 = vpop.f32.mrf.mxu0
    %v289 = vadd.f32 0.0, %v288
    %290 = vmatmul.f32.gmra.mxu0 %v223
    %v291 = vpop.f32.mrf.mxu0
    %v292 = vadd.f32 0.0, %v291
    %293 = vmatmul.f32.gmra.mxu0 %v226
    %v294 = vpop.f32.mrf.mxu0
    %v295 = vadd.f32 0.0, %v294
    %296 = vmatmul.f32.gmra.mxu0 %v229
    %v297 = vpop.f32.mrf.mxu0
    %v298 = vadd.f32 0.0, %v297
    %299 = vmatmul.f32.gmra.mxu0 %v232
    %v300 = vpop.f32.mrf.mxu0
    %v301 = vadd.f32 0.0, %v300
    %302 = vmatmul.f32.gmra.mxu0 %v235
    %v303 = vpop.f32.mrf.mxu0
    %v304 = vadd.f32 0.0, %v303
    %305 = vdwg.mxu0
    %v307 = vperm.slane %v178, 0
    %309 = vmatpush.msra.mxu0 %v304
    %310 = vmatpush.msra.mxu0 %v301
    %311 = vmatpush.msra.mxu0 %v298
    %312 = vmatpush.msra.mxu0 %v295
    %313 = vmatpush.msra.mxu0 %v292
    %314 = vmatpush.msra.mxu0 %v289
    %315 = vmatpush.msra.mxu0 %v286
    %316 = vmatpush.msra.mxu0 %v283
    %317 = vmatpush.msra.mxu0 %v280
    %318 = vmatpush.msra.mxu0 %v277
    %319 = vmatpush.msra.mxu0 %v274
    %320 = vmatpush.msra.mxu0 %v271
    %321 = vmatpush.msra.mxu0 %v268
    %322 = vmatpush.msra.mxu0 %v265
    %323 = vmatpush.msra.mxu0 %v262
    %324 = vmatpush.msra.mxu0 %v259
    %325 = vmatmul.f32.gmra.mxu0 %v93
    %v326 = vpop.f32.mrf.mxu0
    %v327 = vadd.f32 %v307, %v326
    %328 = vmatmul.f32.gmra.mxu0 %v94
    %v329 = vpop.f32.mrf.mxu0
    %v330 = vadd.f32 %v307, %v329
    %331 = vmatmul.f32.gmra.mxu0 %v95
    %v332 = vpop.f32.mrf.mxu0
    %v333 = vadd.f32 %v307, %v332
    %334 = vmatmul.f32.gmra.mxu0 %v96
    %v335 = vpop.f32.mrf.mxu0
    %v336 = vadd.f32 %v307, %v335
    %337 = vmatmul.f32.gmra.mxu0 %v97
    %v338 = vpop.f32.mrf.mxu0
    %v339 = vadd.f32 %v307, %v338
    %340 = vmatmul.f32.gmra.mxu0 %v98
    %v341 = vpop.f32.mrf.mxu0
    %v342 = vadd.f32 %v307, %v341
    %343 = vmatmul.f32.gmra.mxu0 %v99
    %v344 = vpop.f32.mrf.mxu0
    %v345 = vadd.f32 %v307, %v344
    %346 = vmatmul.f32.gmra.mxu0 %v100
    %v347 = vpop.f32.mrf.mxu0
    %v348 = vadd.f32 %v307, %v347
    %349 = vmatmul.f32.gmra.mxu0 %v101
    %v350 = vpop.f32.mrf.mxu0
    %v351 = vadd.f32 %v307, %v350
    %352 = vmatmul.f32.gmra.mxu0 %v102
    %v353 = vpop.f32.mrf.mxu0
    %v354 = vadd.f32 %v307, %v353
    %355 = vmatmul.f32.gmra.mxu0 %v103
    %v356 = vpop.f32.mrf.mxu0
    %v357 = vadd.f32 %v307, %v356
    %358 = vmatmul.f32.gmra.mxu0 %v104
    %v359 = vpop.f32.mrf.mxu0
    %v360 = vadd.f32 %v307, %v359
    %361 = vmatmul.f32.gmra.mxu0 %v105
    %v362 = vpop.f32.mrf.mxu0
    %v363 = vadd.f32 %v307, %v362
    %364 = vmatmul.f32.gmra.mxu0 %v106
    %v365 = vpop.f32.mrf.mxu0
    %v366 = vadd.f32 %v307, %v365
    %367 = vmatmul.f32.gmra.mxu0 %v107
    %v368 = vpop.f32.mrf.mxu0
    %v369 = vadd.f32 %v307, %v368
    %370 = vmatmul.f32.gmra.mxu0 %v108
    %v371 = vpop.f32.mrf.mxu0
    %v372 = vadd.f32 %v307, %v371
    %373 = vdwg.mxu0
    %v374 = vmax.f32 %v327, 0.0
    %v375 = vmax.f32 %v330, 0.0
    %v376 = vmax.f32 %v333, 0.0
    %v377 = vmax.f32 %v336, 0.0
    %v378 = vmax.f32 %v339, 0.0
    %v379 = vmax.f32 %v342, 0.0
    %v380 = vmax.f32 %v345, 0.0
    %v381 = vmax.f32 %v348, 0.0
    %v382 = vmax.f32 %v351, 0.0
    %v383 = vmax.f32 %v354, 0.0
    %v384 = vmax.f32 %v357, 0.0
    %v385 = vmax.f32 %v360, 0.0
    %v386 = vmax.f32 %v363, 0.0
    %v387 = vmax.f32 %v366, 0.0
    %v388 = vmax.f32 %v369, 0.0
    %v389 = vmax.f32 %v372, 0.0
    %vm390 = vcmask 130048
    %v392 = vsel %vm390, %v161, 0
    %v395 = vsel %vm390, %v162, 0
    %v398 = vsel %vm390, %v163, 0
    %v401 = vsel %vm390, %v164, 0
    %v404 = vsel %vm390, %v165, 0
    %v407 = vsel %vm390, %v166, 0
    %v410 = vsel %vm390, %v167, 0
    %v413 = vsel %vm390, %v168, 0
    %v416 = vsel %vm390, %v169, 0
    %v419 = vsel %vm390, %v170, 0
    %v422 = vsel %vm390, %v171, 0
    %v425 = vsel %vm390, %v172, 0
    %v428 = vsel %vm390, %v173, 0
    %v431 = vsel %vm390, %v174, 0
    %v434 = vsel %vm390, %v175, 0
    %v437 = vsel %vm390, %v176, 0
    %439 = vmatpush.msra.mxu0 0.0
    %440 = vmatpush.msra.mxu0 0.0
    %441 = vmatpush.msra.mxu0 0.0
    %442 = vmatpush.msra.mxu0 0.0
    %443 = vmatpush.msra.mxu0 0.0
    %444 = vmatpush.msra.mxu0 0.0
    %445 = vmatpush.msra.mxu0 0.0
    %446 = vmatpush.msra.mxu0 0.0
    %447 = vmatpush.msra.mxu0 0.0
    %448 = vmatpush.msra.mxu0 0.0
    %449 = vmatpush.msra.mxu0 0.0
    %450 = vmatpush.msra.mxu0 0.0
    %451 = vmatpush.msra.mxu0 0.0
    %452 = vmatpush.msra.mxu0 0.0
    %453 = vmatpush.msra.mxu0 %v144
    %454 = vmatpush.msra.mxu0 %v143
    %455 = vmatmul.f32.gmra.mxu0 %v392
    %v456 = vpop.f32.mrf.mxu0
    %v457 = vadd.f32 0.0, %v456
    %458 = vmatmul.f32.gmra.mxu0 %v395
    %v459 = vpop.f32.mrf.mxu0
    %v460 = vadd.f32 0.0, %v459
    %461 = vmatmul.f32.gmra.mxu0 %v398
    %v462 = vpop.f32.mrf.mxu0
    %v463 = vadd.f32 0.0, %v462
    %464 = vmatmul.f32.gmra.mxu0 %v401
    %v465 = vpop.f32.mrf.mxu0
    %v466 = vadd.f32 0.0, %v465
    %467 = vmatmul.f32.gmra.mxu0 %v404
    %v468 = vpop.f32.mrf.mxu0
    %v469 = vadd.f32 0.0, %v468
    %470 = vmatmul.f32.gmra.mxu0 %v407
    %v471 = vpop.f32.mrf.mxu0
    %v472 = vadd.f32 0.0, %v471
    %473 = vmatmul.f32.gmra.mxu0 %v410
    %v474 = vpop.f32.mrf.mxu0
    %v475 = vadd.f32 0.0, %v474
    %476 = vmatmul.f32.gmra.mxu0 %v413
    %v477 = vpop.f32.mrf.mxu0
    %v478 = vadd.f32 0.0, %v477
    %479 = vmatmul.f32.gmra.mxu0 %v416
    %v480 = vpop.f32.mrf.mxu0
    %v481 = vadd.f32 0.0, %v480
    %482 = vmatmul.f32.gmra.mxu0 %v419
    %v483 = vpop.f32.mrf.mxu0
    %v484 = vadd.f32 0.0, %v483
    %485 = vmatmul.f32.gmra.mxu0 %v422
    %v486 = vpop.f32.mrf.mxu0
    %v487 = vadd.f32 0.0, %v486
    %488 = vmatmul.f32.gmra.mxu0 %v425
    %v489 = vpop.f32.mrf.mxu0
    %v490 = vadd.f32 0.0, %v489
    %491 = vmatmul.f32.gmra.mxu0 %v428
    %v492 = vpop.f32.mrf.mxu0
    %v493 = vadd.f32 0.0, %v492
    %494 = vmatmul.f32.gmra.mxu0 %v431
    %v495 = vpop.f32.mrf.mxu0
    %v496 = vadd.f32 0.0, %v495
    %497 = vmatmul.f32.gmra.mxu0 %v434
    %v498 = vpop.f32.mrf.mxu0
    %v499 = vadd.f32 0.0, %v498
    %500 = vmatmul.f32.gmra.mxu0 %v437
    %v501 = vpop.f32.mrf.mxu0
    %v502 = vadd.f32 0.0, %v501
    %503 = vdwg.mxu0
    %504 = vmatpush.msra.mxu0 %v502
    %505 = vmatpush.msra.mxu0 %v499
    %506 = vmatpush.msra.mxu0 %v496
    %507 = vmatpush.msra.mxu0 %v493
    %508 = vmatpush.msra.mxu0 %v490
    %509 = vmatpush.msra.mxu0 %v487
    %510 = vmatpush.msra.mxu0 %v484
    %511 = vmatpush.msra.mxu0 %v481
    %512 = vmatpush.msra.mxu0 %v478
    %513 = vmatpush.msra.mxu0 %v475
    %514 = vmatpush.msra.mxu0 %v472
    %515 = vmatpush.msra.mxu0 %v469
    %516 = vmatpush.msra.mxu0 %v466
    %517 = vmatpush.msra.mxu0 %v463
    %518 = vmatpush.msra.mxu0 %v460
    %519 = vmatpush.msra.mxu0 %v457
    %520 = vmatmul.f32.gmra.mxu0 %v61
    %v521 = vpop.f32.mrf.mxu0
    %v522 = vadd.f32 0.0, %v521
    %523 = vmatmul.f32.gmra.mxu0 %v62
    %v524 = vpop.f32.mrf.mxu0
    %v525 = vadd.f32 0.0, %v524
    %526 = vmatmul.f32.gmra.mxu0 %v63
    %v527 = vpop.f32.mrf.mxu0
    %v528 = vadd.f32 0.0, %v527
    %529 = vmatmul.f32.gmra.mxu0 %v64
    %v530 = vpop.f32.mrf.mxu0
    %v531 = vadd.f32 0.0, %v530
    %532 = vmatmul.f32.gmra.mxu0 %v65
    %v533 = vpop.f32.mrf.mxu0
    %v534 = vadd.f32 0.0, %v533
    %535 = vmatmul.f32.gmra.mxu0 %v66
    %v536 = vpop.f32.mrf.mxu0
    %v537 = vadd.f32 0.0, %v536
    %538 = vmatmul.f32.gmra.mxu0 %v67
    %v539 = vpop.f32.mrf.mxu0
    %v540 = vadd.f32 0.0, %v539
    %541 = vmatmul.f32.gmra.mxu0 %v68
    %v542 = vpop.f32.mrf.mxu0
    %v543 = vadd.f32 0.0, %v542
    %544 = vmatmul.f32.gmra.mxu0 %v69
    %v545 = vpop.f32.mrf.mxu0
    %v546 = vadd.f32 0.0, %v545
    %547 = vmatmul.f32.gmra.mxu0 %v70
    %v548 = vpop.f32.mrf.mxu0
    %v549 = vadd.f32 0.0, %v548
    %550 = vmatmul.f32.gmra.mxu0 %v71
    %v551 = vpop.f32.mrf.mxu0
    %v552 = vadd.f32 0.0, %v551
    %553 = vmatmul.f32.gmra.mxu0 %v72
    %v554 = vpop.f32.mrf.mxu0
    %v555 = vadd.f32 0.0, %v554
    %556 = vmatmul.f32.gmra.mxu0 %v73
    %v557 = vpop.f32.mrf.mxu0
    %v558 = vadd.f32 0.0, %v557
    %559 = vmatmul.f32.gmra.mxu0 %v74
    %v560 = vpop.f32.mrf.mxu0
    %v561 = vadd.f32 0.0, %v560
    %562 = vmatmul.f32.gmra.mxu0 %v75
    %v563 = vpop.f32.mrf.mxu0
    %v564 = vadd.f32 0.0, %v563
    %565 = vmatmul.f32.gmra.mxu0 %v76
    %v566 = vpop.f32.mrf.mxu0
    %v567 = vadd.f32 0.0, %v566
    %568 = vdwg.mxu0
    %v569 = vmul.f32 %v374, %v522
    %v570 = vmul.f32 %v375, %v525
    %v571 = vmul.f32 %v376, %v528
    %v572 = vmul.f32 %v377, %v531
    %v573 = vmul.f32 %v378, %v534
    %v574 = vmul.f32 %v379, %v537
    %v575 = vmul.f32 %v380, %v540
    %v576 = vmul.f32 %v381, %v543
    %v577 = vmul.f32 %v382, %v546
    %v578 = vmul.f32 %v383, %v549
    %v579 = vmul.f32 %v384, %v552
    %v580 = vmul.f32 %v385, %v555
    %v581 = vmul.f32 %v386, %v558
    %v582 = vmul.f32 %v387, %v561
    %v583 = vmul.f32 %v388, %v564
    %v584 = vmul.f32 %v389, %v567
    %585 = vmatpush.msra.mxu0 %v584
    %586 = vmatpush.msra.mxu0 %v583
    %587 = vmatpush.msra.mxu0 %v582
    %588 = vmatpush.msra.mxu0 %v581
    %589 = vmatpush.msra.mxu0 %v580
    %590 = vmatpush.msra.mxu0 %v579
    %591 = vmatpush.msra.mxu0 %v578
    %592 = vmatpush.msra.mxu0 %v577
    %593 = vmatpush.msra.mxu0 %v576
    %594 = vmatpush.msra.mxu0 %v575
    %595 = vmatpush.msra.mxu0 %v574
    %596 = vmatpush.msra.mxu0 %v573
    %597 = vmatpush.msra.mxu0 %v572
    %598 = vmatpush.msra.mxu0 %v571
    %599 = vmatpush.msra.mxu0 %v570
    %600 = vmatpush.msra.mxu0 %v569
    %601 = vmatmul.f32.gmra.mxu0 %v125
    %v602 = vpop.f32.mrf.mxu0
    %v603 = vadd.f32 0.0, %v602
    %604 = vmatmul.f32.gmra.mxu0 %v126
    %v605 = vpop.f32.mrf.mxu0
    %v606 = vadd.f32 0.0, %v605
    %607 = vmatmul.f32.gmra.mxu0 %v127
    %v608 = vpop.f32.mrf.mxu0
    %v609 = vadd.f32 0.0, %v608
    %610 = vmatmul.f32.gmra.mxu0 %v128
    %v611 = vpop.f32.mrf.mxu0
    %v612 = vadd.f32 0.0, %v611
    %613 = vmatmul.f32.gmra.mxu0 %v129
    %v614 = vpop.f32.mrf.mxu0
    %v615 = vadd.f32 0.0, %v614
    %616 = vmatmul.f32.gmra.mxu0 %v130
    %v617 = vpop.f32.mrf.mxu0
    %v618 = vadd.f32 0.0, %v617
    %619 = vmatmul.f32.gmra.mxu0 %v131
    %v620 = vpop.f32.mrf.mxu0
    %v621 = vadd.f32 0.0, %v620
    %622 = vmatmul.f32.gmra.mxu0 %v132
    %v623 = vpop.f32.mrf.mxu0
    %v624 = vadd.f32 0.0, %v623
    %625 = vmatmul.f32.gmra.mxu0 %v133
    %v626 = vpop.f32.mrf.mxu0
    %v627 = vadd.f32 0.0, %v626
    %628 = vmatmul.f32.gmra.mxu0 %v134
    %v629 = vpop.f32.mrf.mxu0
    %v630 = vadd.f32 0.0, %v629
    %631 = vmatmul.f32.gmra.mxu0 %v135
    %v632 = vpop.f32.mrf.mxu0
    %v633 = vadd.f32 0.0, %v632
    %634 = vmatmul.f32.gmra.mxu0 %v136
    %v635 = vpop.f32.mrf.mxu0
    %v636 = vadd.f32 0.0, %v635
    %637 = vmatmul.f32.gmra.mxu0 %v137
    %v638 = vpop.f32.mrf.mxu0
    %v639 = vadd.f32 0.0, %v638
    %640 = vmatmul.f32.gmra.mxu0 %v138
    %v641 = vpop.f32.mrf.mxu0
    %v642 = vadd.f32 0.0, %v641
    %643 = vmatmul.f32.gmra.mxu0 %v139
    %v644 = vpop.f32.mrf.mxu0
    %v645 = vadd.f32 0.0, %v644
    %646 = vmatmul.f32.gmra.mxu0 %v140
    %v647 = vpop.f32.mrf.mxu0
    %v648 = vadd.f32 0.0, %v647
    %649 = vdwg.mxu0
    %v651 = vperm.slane %v187, 0
    %vm653 = vcmask 523264
    %v655 = vsel %vm653, %v603, 0
    %v658 = vsel %vm653, %v606, 0
    %v661 = vsel %vm653, %v609, 0
    %v664 = vsel %vm653, %v612, 0
    %v667 = vsel %vm653, %v615, 0
    %v670 = vsel %vm653, %v618, 0
    %v673 = vsel %vm653, %v621, 0
    %v676 = vsel %vm653, %v624, 0
    %v679 = vsel %vm653, %v627, 0
    %v682 = vsel %vm653, %v630, 0
    %v685 = vsel %vm653, %v633, 0
    %v688 = vsel %vm653, %v636, 0
    %v691 = vsel %vm653, %v639, 0
    %v694 = vsel %vm653, %v642, 0
    %v697 = vsel %vm653, %v645, 0
    %v700 = vsel %vm653, %v648, 0
    %702 = vmatpush.msra.mxu0 0.0
    %703 = vmatpush.msra.mxu0 0.0
    %704 = vmatpush.msra.mxu0 0.0
    %705 = vmatpush.msra.mxu0 0.0
    %706 = vmatpush.msra.mxu0 0.0
    %707 = vmatpush.msra.mxu0 0.0
    %708 = vmatpush.msra.mxu0 0.0
    %709 = vmatpush.msra.mxu0 0.0
    %710 = vmatpush.msra.mxu0 %v186
    %711 = vmatpush.msra.mxu0 %v185
    %712 = vmatpush.msra.mxu0 %v184
    %713 = vmatpush.msra.mxu0 %v183
    %714 = vmatpush.msra.mxu0 %v182
    %715 = vmatpush.msra.mxu0 %v181
    %716 = vmatpush.msra.mxu0 %v180
    %717 = vmatpush.msra.mxu0 %v179
    %718 = vmatmul.f32.gmra.mxu0 %v655
    %v719 = vpop.f32.mrf.mxu0
    %v720 = vadd.f32 %v651, %v719
    %721 = vmatmul.f32.gmra.mxu0 %v658
    %v722 = vpop.f32.mrf.mxu0
    %v723 = vadd.f32 %v651, %v722
    %724 = vmatmul.f32.gmra.mxu0 %v661
    %v725 = vpop.f32.mrf.mxu0
    %v726 = vadd.f32 %v651, %v725
    %727 = vmatmul.f32.gmra.mxu0 %v664
    %v728 = vpop.f32.mrf.mxu0
    %v729 = vadd.f32 %v651, %v728
    %730 = vmatmul.f32.gmra.mxu0 %v667
    %v731 = vpop.f32.mrf.mxu0
    %v732 = vadd.f32 %v651, %v731
    %733 = vmatmul.f32.gmra.mxu0 %v670
    %v734 = vpop.f32.mrf.mxu0
    %v735 = vadd.f32 %v651, %v734
    %736 = vmatmul.f32.gmra.mxu0 %v673
    %v737 = vpop.f32.mrf.mxu0
    %v738 = vadd.f32 %v651, %v737
    %739 = vmatmul.f32.gmra.mxu0 %v676
    %v740 = vpop.f32.mrf.mxu0
    %v741 = vadd.f32 %v651, %v740
    %742 = vmatmul.f32.gmra.mxu0 %v679
    %v743 = vpop.f32.mrf.mxu0
    %v744 = vadd.f32 %v651, %v743
    %745 = vmatmul.f32.gmra.mxu0 %v682
    %v746 = vpop.f32.mrf.mxu0
    %v747 = vadd.f32 %v651, %v746
    %748 = vmatmul.f32.gmra.mxu0 %v685
    %v749 = vpop.f32.mrf.mxu0
    %v750 = vadd.f32 %v651, %v749
    %751 = vmatmul.f32.gmra.mxu0 %v688
    %v752 = vpop.f32.mrf.mxu0
    %v753 = vadd.f32 %v651, %v752
    %754 = vmatmul.f32.gmra.mxu0 %v691
    %v755 = vpop.f32.mrf.mxu0
    %v756 = vadd.f32 %v651, %v755
    %757 = vmatmul.f32.gmra.mxu0 %v694
    %v758 = vpop.f32.mrf.mxu0
    %v759 = vadd.f32 %v651, %v758
    %760 = vmatmul.f32.gmra.mxu0 %v697
    %v761 = vpop.f32.mrf.mxu0
    %v762 = vadd.f32 %v651, %v761
    %763 = vmatmul.f32.gmra.mxu0 %v700
    %v764 = vpop.f32.mrf.mxu0
    %v765 = vadd.f32 %v651, %v764
    %766 = vdwg.mxu0
    %s767 = scalar_lea.vmem %s7, 2
    %v768 = vld [vmem:[%s767] sm:$0x3]
    %s769 = scalar_lea.vmem %s8, 1
    %v770 = vld [vmem:[%s769] sm:$0x1]
    %s771 = scalar_lea.vmem %s9, 64
    %v772 = vld [vmem:[%s771] sm:$0xff]
    %v773 = vld [vmem:[%s771 + $0x8] sm:$0xff]
    %v774 = vld [vmem:[%s771 + $0x10] sm:$0xff]
    %v775 = vld [vmem:[%s771 + $0x18] sm:$0xff]
    %v776 = vld [vmem:[%s771 + $0x20] sm:$0xff]
    %v777 = vld [vmem:[%s771 + $0x28] sm:$0xff]
    %v778 = vld [vmem:[%s771 + $0x30] sm:$0xff]
    %v779 = vld [vmem:[%s771 + $0x38] sm:$0xff]
    %s780 = scalar_lea.vmem %s10, 1
    %v781 = vld [vmem:[%s780] sm:$0x1]
    %v783 = vsel %vm237, %v768, 0
    %785 = vmatpush.msra.mxu0 0.0
    %786 = vmatpush.msra.mxu0 0.0
    %787 = vmatpush.msra.mxu0 0.0
    %788 = vmatpush.msra.mxu0 0.0
    %789 = vmatpush.msra.mxu0 0.0
    %790 = vmatpush.msra.mxu0 0.0
    %791 = vmatpush.msra.mxu0 0.0
    %792 = vmatpush.msra.mxu0 0.0
    %793 = vmatpush.msra.mxu0 0.0
    %794 = vmatpush.msra.mxu0 0.0
    %795 = vmatpush.msra.mxu0 0.0
    %796 = vmatpush.msra.mxu0 0.0
    %797 = vmatpush.msra.mxu0 0.0
    %798 = vmatpush.msra.mxu0 0.0
    %799 = vmatpush.msra.mxu0 0.0
    %800 = vmatpush.msra.mxu0 %v783
    %801 = vmatmul.f32.gmra.mxu0 %v190
    %v802 = vpop.f32.mrf.mxu0
    %v803 = vadd.f32 0.0, %v802
    %804 = vmatmul.f32.gmra.mxu0 %v193
    %v805 = vpop.f32.mrf.mxu0
    %v806 = vadd.f32 0.0, %v805
    %807 = vmatmul.f32.gmra.mxu0 %v196
    %v808 = vpop.f32.mrf.mxu0
    %v809 = vadd.f32 0.0, %v808
    %810 = vmatmul.f32.gmra.mxu0 %v199
    %v811 = vpop.f32.mrf.mxu0
    %v812 = vadd.f32 0.0, %v811
    %813 = vmatmul.f32.gmra.mxu0 %v202
    %v814 = vpop.f32.mrf.mxu0
    %v815 = vadd.f32 0.0, %v814
    %816 = vmatmul.f32.gmra.mxu0 %v205
    %v817 = vpop.f32.mrf.mxu0
    %v818 = vadd.f32 0.0, %v817
    %819 = vmatmul.f32.gmra.mxu0 %v208
    %v820 = vpop.f32.mrf.mxu0
    %v821 = vadd.f32 0.0, %v820
    %822 = vmatmul.f32.gmra.mxu0 %v211
    %v823 = vpop.f32.mrf.mxu0
    %v824 = vadd.f32 0.0, %v823
    %825 = vmatmul.f32.gmra.mxu0 %v214
    %v826 = vpop.f32.mrf.mxu0
    %v827 = vadd.f32 0.0, %v826
    %828 = vmatmul.f32.gmra.mxu0 %v217
    %v829 = vpop.f32.mrf.mxu0
    %v830 = vadd.f32 0.0, %v829
    %831 = vmatmul.f32.gmra.mxu0 %v220
    %v832 = vpop.f32.mrf.mxu0
    %v833 = vadd.f32 0.0, %v832
    %834 = vmatmul.f32.gmra.mxu0 %v223
    %v835 = vpop.f32.mrf.mxu0
    %v836 = vadd.f32 0.0, %v835
    %837 = vmatmul.f32.gmra.mxu0 %v226
    %v838 = vpop.f32.mrf.mxu0
    %v839 = vadd.f32 0.0, %v838
    %840 = vmatmul.f32.gmra.mxu0 %v229
    %v841 = vpop.f32.mrf.mxu0
    %v842 = vadd.f32 0.0, %v841
    %843 = vmatmul.f32.gmra.mxu0 %v232
    %v844 = vpop.f32.mrf.mxu0
    %v845 = vadd.f32 0.0, %v844
    %846 = vmatmul.f32.gmra.mxu0 %v235
    %v847 = vpop.f32.mrf.mxu0
    %v848 = vadd.f32 0.0, %v847
    %849 = vdwg.mxu0
    %v851 = vperm.slane %v770, 0
    %853 = vmatpush.msra.mxu0 %v848
    %854 = vmatpush.msra.mxu0 %v845
    %855 = vmatpush.msra.mxu0 %v842
    %856 = vmatpush.msra.mxu0 %v839
    %857 = vmatpush.msra.mxu0 %v836
    %858 = vmatpush.msra.mxu0 %v833
    %859 = vmatpush.msra.mxu0 %v830
    %860 = vmatpush.msra.mxu0 %v827
    %861 = vmatpush.msra.mxu0 %v824
    %862 = vmatpush.msra.mxu0 %v821
    %863 = vmatpush.msra.mxu0 %v818
    %864 = vmatpush.msra.mxu0 %v815
    %865 = vmatpush.msra.mxu0 %v812
    %866 = vmatpush.msra.mxu0 %v809
    %867 = vmatpush.msra.mxu0 %v806
    %868 = vmatpush.msra.mxu0 %v803
    %869 = vmatmul.f32.gmra.mxu0 %v93
    %v870 = vpop.f32.mrf.mxu0
    %v871 = vadd.f32 %v851, %v870
    %872 = vmatmul.f32.gmra.mxu0 %v94
    %v873 = vpop.f32.mrf.mxu0
    %v874 = vadd.f32 %v851, %v873
    %875 = vmatmul.f32.gmra.mxu0 %v95
    %v876 = vpop.f32.mrf.mxu0
    %v877 = vadd.f32 %v851, %v876
    %878 = vmatmul.f32.gmra.mxu0 %v96
    %v879 = vpop.f32.mrf.mxu0
    %v880 = vadd.f32 %v851, %v879
    %881 = vmatmul.f32.gmra.mxu0 %v97
    %v882 = vpop.f32.mrf.mxu0
    %v883 = vadd.f32 %v851, %v882
    %884 = vmatmul.f32.gmra.mxu0 %v98
    %v885 = vpop.f32.mrf.mxu0
    %v886 = vadd.f32 %v851, %v885
    %887 = vmatmul.f32.gmra.mxu0 %v99
    %v888 = vpop.f32.mrf.mxu0
    %v889 = vadd.f32 %v851, %v888
    %890 = vmatmul.f32.gmra.mxu0 %v100
    %v891 = vpop.f32.mrf.mxu0
    %v892 = vadd.f32 %v851, %v891
    %893 = vmatmul.f32.gmra.mxu0 %v101
    %v894 = vpop.f32.mrf.mxu0
    %v895 = vadd.f32 %v851, %v894
    %896 = vmatmul.f32.gmra.mxu0 %v102
    %v897 = vpop.f32.mrf.mxu0
    %v898 = vadd.f32 %v851, %v897
    %899 = vmatmul.f32.gmra.mxu0 %v103
    %v900 = vpop.f32.mrf.mxu0
    %v901 = vadd.f32 %v851, %v900
    %902 = vmatmul.f32.gmra.mxu0 %v104
    %v903 = vpop.f32.mrf.mxu0
    %v904 = vadd.f32 %v851, %v903
    %905 = vmatmul.f32.gmra.mxu0 %v105
    %v906 = vpop.f32.mrf.mxu0
    %v907 = vadd.f32 %v851, %v906
    %908 = vmatmul.f32.gmra.mxu0 %v106
    %v909 = vpop.f32.mrf.mxu0
    %v910 = vadd.f32 %v851, %v909
    %911 = vmatmul.f32.gmra.mxu0 %v107
    %v912 = vpop.f32.mrf.mxu0
    %v913 = vadd.f32 %v851, %v912
    %914 = vmatmul.f32.gmra.mxu0 %v108
    %v915 = vpop.f32.mrf.mxu0
    %v916 = vadd.f32 %v851, %v915
    %917 = vdwg.mxu0
    %v918 = vmax.f32 %v871, 0.0
    %v919 = vmax.f32 %v874, 0.0
    %v920 = vmax.f32 %v877, 0.0
    %v921 = vmax.f32 %v880, 0.0
    %v922 = vmax.f32 %v883, 0.0
    %v923 = vmax.f32 %v886, 0.0
    %v924 = vmax.f32 %v889, 0.0
    %v925 = vmax.f32 %v892, 0.0
    %v926 = vmax.f32 %v895, 0.0
    %v927 = vmax.f32 %v898, 0.0
    %v928 = vmax.f32 %v901, 0.0
    %v929 = vmax.f32 %v904, 0.0
    %v930 = vmax.f32 %v907, 0.0
    %v931 = vmax.f32 %v910, 0.0
    %v932 = vmax.f32 %v913, 0.0
    %v933 = vmax.f32 %v916, 0.0
    %v935 = vsel %vm390, %v720, 0
    %v938 = vsel %vm390, %v723, 0
    %v941 = vsel %vm390, %v726, 0
    %v944 = vsel %vm390, %v729, 0
    %v947 = vsel %vm390, %v732, 0
    %v950 = vsel %vm390, %v735, 0
    %v953 = vsel %vm390, %v738, 0
    %v956 = vsel %vm390, %v741, 0
    %v959 = vsel %vm390, %v744, 0
    %v962 = vsel %vm390, %v747, 0
    %v965 = vsel %vm390, %v750, 0
    %v968 = vsel %vm390, %v753, 0
    %v971 = vsel %vm390, %v756, 0
    %v974 = vsel %vm390, %v759, 0
    %v977 = vsel %vm390, %v762, 0
    %v980 = vsel %vm390, %v765, 0
    %982 = vmatpush.msra.mxu0 0.0
    %983 = vmatpush.msra.mxu0 0.0
    %984 = vmatpush.msra.mxu0 0.0
    %985 = vmatpush.msra.mxu0 0.0
    %986 = vmatpush.msra.mxu0 0.0
    %987 = vmatpush.msra.mxu0 0.0
    %988 = vmatpush.msra.mxu0 0.0
    %989 = vmatpush.msra.mxu0 0.0
    %990 = vmatpush.msra.mxu0 0.0
    %991 = vmatpush.msra.mxu0 0.0
    %992 = vmatpush.msra.mxu0 0.0
    %993 = vmatpush.msra.mxu0 0.0
    %994 = vmatpush.msra.mxu0 0.0
    %995 = vmatpush.msra.mxu0 0.0
    %996 = vmatpush.msra.mxu0 %v144
    %997 = vmatpush.msra.mxu0 %v143
    %998 = vmatmul.f32.gmra.mxu0 %v935
    %v999 = vpop.f32.mrf.mxu0
    %v1000 = vadd.f32 0.0, %v999
    %1001 = vmatmul.f32.gmra.mxu0 %v938
    %v1002 = vpop.f32.mrf.mxu0
    %v1003 = vadd.f32 0.0, %v1002
    %1004 = vmatmul.f32.gmra.mxu0 %v941
    %v1005 = vpop.f32.mrf.mxu0
    %v1006 = vadd.f32 0.0, %v1005
    %1007 = vmatmul.f32.gmra.mxu0 %v944
    %v1008 = vpop.f32.mrf.mxu0
    %v1009 = vadd.f32 0.0, %v1008
    %1010 = vmatmul.f32.gmra.mxu0 %v947
    %v1011 = vpop.f32.mrf.mxu0
    %v1012 = vadd.f32 0.0, %v1011
    %1013 = vmatmul.f32.gmra.mxu0 %v950
    %v1014 = vpop.f32.mrf.mxu0
    %v1015 = vadd.f32 0.0, %v1014
    %1016 = vmatmul.f32.gmra.mxu0 %v953
    %v1017 = vpop.f32.mrf.mxu0
    %v1018 = vadd.f32 0.0, %v1017
    %1019 = vmatmul.f32.gmra.mxu0 %v956
    %v1020 = vpop.f32.mrf.mxu0
    %v1021 = vadd.f32 0.0, %v1020
    %1022 = vmatmul.f32.gmra.mxu0 %v959
    %v1023 = vpop.f32.mrf.mxu0
    %v1024 = vadd.f32 0.0, %v1023
    %1025 = vmatmul.f32.gmra.mxu0 %v962
    %v1026 = vpop.f32.mrf.mxu0
    %v1027 = vadd.f32 0.0, %v1026
    %1028 = vmatmul.f32.gmra.mxu0 %v965
    %v1029 = vpop.f32.mrf.mxu0
    %v1030 = vadd.f32 0.0, %v1029
    %1031 = vmatmul.f32.gmra.mxu0 %v968
    %v1032 = vpop.f32.mrf.mxu0
    %v1033 = vadd.f32 0.0, %v1032
    %1034 = vmatmul.f32.gmra.mxu0 %v971
    %v1035 = vpop.f32.mrf.mxu0
    %v1036 = vadd.f32 0.0, %v1035
    %1037 = vmatmul.f32.gmra.mxu0 %v974
    %v1038 = vpop.f32.mrf.mxu0
    %v1039 = vadd.f32 0.0, %v1038
    %1040 = vmatmul.f32.gmra.mxu0 %v977
    %v1041 = vpop.f32.mrf.mxu0
    %v1042 = vadd.f32 0.0, %v1041
    %1043 = vmatmul.f32.gmra.mxu0 %v980
    %v1044 = vpop.f32.mrf.mxu0
    %v1045 = vadd.f32 0.0, %v1044
    %1046 = vdwg.mxu0
    %1047 = vmatpush.msra.mxu0 %v1045
    %1048 = vmatpush.msra.mxu0 %v1042
    %1049 = vmatpush.msra.mxu0 %v1039
    %1050 = vmatpush.msra.mxu0 %v1036
    %1051 = vmatpush.msra.mxu0 %v1033
    %1052 = vmatpush.msra.mxu0 %v1030
    %1053 = vmatpush.msra.mxu0 %v1027
    %1054 = vmatpush.msra.mxu0 %v1024
    %1055 = vmatpush.msra.mxu0 %v1021
    %1056 = vmatpush.msra.mxu0 %v1018
    %1057 = vmatpush.msra.mxu0 %v1015
    %1058 = vmatpush.msra.mxu0 %v1012
    %1059 = vmatpush.msra.mxu0 %v1009
    %1060 = vmatpush.msra.mxu0 %v1006
    %1061 = vmatpush.msra.mxu0 %v1003
    %1062 = vmatpush.msra.mxu0 %v1000
    %1063 = vmatmul.f32.gmra.mxu0 %v61
    %v1064 = vpop.f32.mrf.mxu0
    %v1065 = vadd.f32 0.0, %v1064
    %1066 = vmatmul.f32.gmra.mxu0 %v62
    %v1067 = vpop.f32.mrf.mxu0
    %v1068 = vadd.f32 0.0, %v1067
    %1069 = vmatmul.f32.gmra.mxu0 %v63
    %v1070 = vpop.f32.mrf.mxu0
    %v1071 = vadd.f32 0.0, %v1070
    %1072 = vmatmul.f32.gmra.mxu0 %v64
    %v1073 = vpop.f32.mrf.mxu0
    %v1074 = vadd.f32 0.0, %v1073
    %1075 = vmatmul.f32.gmra.mxu0 %v65
    %v1076 = vpop.f32.mrf.mxu0
    %v1077 = vadd.f32 0.0, %v1076
    %1078 = vmatmul.f32.gmra.mxu0 %v66
    %v1079 = vpop.f32.mrf.mxu0
    %v1080 = vadd.f32 0.0, %v1079
    %1081 = vmatmul.f32.gmra.mxu0 %v67
    %v1082 = vpop.f32.mrf.mxu0
    %v1083 = vadd.f32 0.0, %v1082
    %1084 = vmatmul.f32.gmra.mxu0 %v68
    %v1085 = vpop.f32.mrf.mxu0
    %v1086 = vadd.f32 0.0, %v1085
    %1087 = vmatmul.f32.gmra.mxu0 %v69
    %v1088 = vpop.f32.mrf.mxu0
    %v1089 = vadd.f32 0.0, %v1088
    %1090 = vmatmul.f32.gmra.mxu0 %v70
    %v1091 = vpop.f32.mrf.mxu0
    %v1092 = vadd.f32 0.0, %v1091
    %1093 = vmatmul.f32.gmra.mxu0 %v71
    %v1094 = vpop.f32.mrf.mxu0
    %v1095 = vadd.f32 0.0, %v1094
    %1096 = vmatmul.f32.gmra.mxu0 %v72
    %v1097 = vpop.f32.mrf.mxu0
    %v1098 = vadd.f32 0.0, %v1097
    %1099 = vmatmul.f32.gmra.mxu0 %v73
    %v1100 = vpop.f32.mrf.mxu0
    %v1101 = vadd.f32 0.0, %v1100
    %1102 = vmatmul.f32.gmra.mxu0 %v74
    %v1103 = vpop.f32.mrf.mxu0
    %v1104 = vadd.f32 0.0, %v1103
    %1105 = vmatmul.f32.gmra.mxu0 %v75
    %v1106 = vpop.f32.mrf.mxu0
    %v1107 = vadd.f32 0.0, %v1106
    %1108 = vmatmul.f32.gmra.mxu0 %v76
    %v1109 = vpop.f32.mrf.mxu0
    %v1110 = vadd.f32 0.0, %v1109
    %1111 = vdwg.mxu0
    %v1112 = vmul.f32 %v918, %v1065
    %v1113 = vmul.f32 %v919, %v1068
    %v1114 = vmul.f32 %v920, %v1071
    %v1115 = vmul.f32 %v921, %v1074
    %v1116 = vmul.f32 %v922, %v1077
    %v1117 = vmul.f32 %v923, %v1080
    %v1118 = vmul.f32 %v924, %v1083
    %v1119 = vmul.f32 %v925, %v1086
    %v1120 = vmul.f32 %v926, %v1089
    %v1121 = vmul.f32 %v927, %v1092
    %v1122 = vmul.f32 %v928, %v1095
    %v1123 = vmul.f32 %v929, %v1098
    %v1124 = vmul.f32 %v930, %v1101
    %v1125 = vmul.f32 %v931, %v1104
    %v1126 = vmul.f32 %v932, %v1107
    %v1127 = vmul.f32 %v933, %v1110
    %1128 = vmatpush.msra.mxu0 %v1127
    %1129 = vmatpush.msra.mxu0 %v1126
    %1130 = vmatpush.msra.mxu0 %v1125
    %1131 = vmatpush.msra.mxu0 %v1124
    %1132 = vmatpush.msra.mxu0 %v1123
    %1133 = vmatpush.msra.mxu0 %v1122
    %1134 = vmatpush.msra.mxu0 %v1121
    %1135 = vmatpush.msra.mxu0 %v1120
    %1136 = vmatpush.msra.mxu0 %v1119
    %1137 = vmatpush.msra.mxu0 %v1118
    %1138 = vmatpush.msra.mxu0 %v1117
    %1139 = vmatpush.msra.mxu0 %v1116
    %1140 = vmatpush.msra.mxu0 %v1115
    %1141 = vmatpush.msra.mxu0 %v1114
    %1142 = vmatpush.msra.mxu0 %v1113
    %1143 = vmatpush.msra.mxu0 %v1112
    %1144 = vmatmul.f32.gmra.mxu0 %v125
    %v1145 = vpop.f32.mrf.mxu0
    %v1146 = vadd.f32 0.0, %v1145
    %1147 = vmatmul.f32.gmra.mxu0 %v126
    %v1148 = vpop.f32.mrf.mxu0
    %v1149 = vadd.f32 0.0, %v1148
    %1150 = vmatmul.f32.gmra.mxu0 %v127
    %v1151 = vpop.f32.mrf.mxu0
    %v1152 = vadd.f32 0.0, %v1151
    %1153 = vmatmul.f32.gmra.mxu0 %v128
    %v1154 = vpop.f32.mrf.mxu0
    %v1155 = vadd.f32 0.0, %v1154
    %1156 = vmatmul.f32.gmra.mxu0 %v129
    %v1157 = vpop.f32.mrf.mxu0
    %v1158 = vadd.f32 0.0, %v1157
    %1159 = vmatmul.f32.gmra.mxu0 %v130
    %v1160 = vpop.f32.mrf.mxu0
    %v1161 = vadd.f32 0.0, %v1160
    %1162 = vmatmul.f32.gmra.mxu0 %v131
    %v1163 = vpop.f32.mrf.mxu0
    %v1164 = vadd.f32 0.0, %v1163
    %1165 = vmatmul.f32.gmra.mxu0 %v132
    %v1166 = vpop.f32.mrf.mxu0
    %v1167 = vadd.f32 0.0, %v1166
    %1168 = vmatmul.f32.gmra.mxu0 %v133
    %v1169 = vpop.f32.mrf.mxu0
    %v1170 = vadd.f32 0.0, %v1169
    %1171 = vmatmul.f32.gmra.mxu0 %v134
    %v1172 = vpop.f32.mrf.mxu0
    %v1173 = vadd.f32 0.0, %v1172
    %1174 = vmatmul.f32.gmra.mxu0 %v135
    %v1175 = vpop.f32.mrf.mxu0
    %v1176 = vadd.f32 0.0, %v1175
    %1177 = vmatmul.f32.gmra.mxu0 %v136
    %v1178 = vpop.f32.mrf.mxu0
    %v1179 = vadd.f32 0.0, %v1178
    %1180 = vmatmul.f32.gmra.mxu0 %v137
    %v1181 = vpop.f32.mrf.mxu0
    %v1182 = vadd.f32 0.0, %v1181
    %1183 = vmatmul.f32.gmra.mxu0 %v138
    %v1184 = vpop.f32.mrf.mxu0
    %v1185 = vadd.f32 0.0, %v1184
    %1186 = vmatmul.f32.gmra.mxu0 %v139
    %v1187 = vpop.f32.mrf.mxu0
    %v1188 = vadd.f32 0.0, %v1187
    %1189 = vmatmul.f32.gmra.mxu0 %v140
    %v1190 = vpop.f32.mrf.mxu0
    %v1191 = vadd.f32 0.0, %v1190
    %1192 = vdwg.mxu0
    %v1194 = vperm.slane %v781, 0
    %v1197 = vsel %vm653, %v1146, 0
    %v1200 = vsel %vm653, %v1149, 0
    %v1203 = vsel %vm653, %v1152, 0
    %v1206 = vsel %vm653, %v1155, 0
    %v1209 = vsel %vm653, %v1158, 0
    %v1212 = vsel %vm653, %v1161, 0
    %v1215 = vsel %vm653, %v1164, 0
    %v1218 = vsel %vm653, %v1167, 0
    %v1221 = vsel %vm653, %v1170, 0
    %v1224 = vsel %vm653, %v1173, 0
    %v1227 = vsel %vm653, %v1176, 0
    %v1230 = vsel %vm653, %v1179, 0
    %v1233 = vsel %vm653, %v1182, 0
    %v1236 = vsel %vm653, %v1185, 0
    %v1239 = vsel %vm653, %v1188, 0
    %v1242 = vsel %vm653, %v1191, 0
    %1244 = vmatpush.msra.mxu0 0.0
    %1245 = vmatpush.msra.mxu0 0.0
    %1246 = vmatpush.msra.mxu0 0.0
    %1247 = vmatpush.msra.mxu0 0.0
    %1248 = vmatpush.msra.mxu0 0.0
    %1249 = vmatpush.msra.mxu0 0.0
    %1250 = vmatpush.msra.mxu0 0.0
    %1251 = vmatpush.msra.mxu0 0.0
    %1252 = vmatpush.msra.mxu0 %v779
    %1253 = vmatpush.msra.mxu0 %v778
    %1254 = vmatpush.msra.mxu0 %v777
    %1255 = vmatpush.msra.mxu0 %v776
    %1256 = vmatpush.msra.mxu0 %v775
    %1257 = vmatpush.msra.mxu0 %v774
    %1258 = vmatpush.msra.mxu0 %v773
    %1259 = vmatpush.msra.mxu0 %v772
    %1260 = vmatmul.f32.gmra.mxu0 %v1197
    %v1261 = vpop.f32.mrf.mxu0
    %v1262 = vadd.f32 %v1194, %v1261
    %1263 = vmatmul.f32.gmra.mxu0 %v1200
    %v1264 = vpop.f32.mrf.mxu0
    %v1265 = vadd.f32 %v1194, %v1264
    %1266 = vmatmul.f32.gmra.mxu0 %v1203
    %v1267 = vpop.f32.mrf.mxu0
    %v1268 = vadd.f32 %v1194, %v1267
    %1269 = vmatmul.f32.gmra.mxu0 %v1206
    %v1270 = vpop.f32.mrf.mxu0
    %v1271 = vadd.f32 %v1194, %v1270
    %1272 = vmatmul.f32.gmra.mxu0 %v1209
    %v1273 = vpop.f32.mrf.mxu0
    %v1274 = vadd.f32 %v1194, %v1273
    %1275 = vmatmul.f32.gmra.mxu0 %v1212
    %v1276 = vpop.f32.mrf.mxu0
    %v1277 = vadd.f32 %v1194, %v1276
    %1278 = vmatmul.f32.gmra.mxu0 %v1215
    %v1279 = vpop.f32.mrf.mxu0
    %v1280 = vadd.f32 %v1194, %v1279
    %1281 = vmatmul.f32.gmra.mxu0 %v1218
    %v1282 = vpop.f32.mrf.mxu0
    %v1283 = vadd.f32 %v1194, %v1282
    %1284 = vmatmul.f32.gmra.mxu0 %v1221
    %v1285 = vpop.f32.mrf.mxu0
    %v1286 = vadd.f32 %v1194, %v1285
    %1287 = vmatmul.f32.gmra.mxu0 %v1224
    %v1288 = vpop.f32.mrf.mxu0
    %v1289 = vadd.f32 %v1194, %v1288
    %1290 = vmatmul.f32.gmra.mxu0 %v1227
    %v1291 = vpop.f32.mrf.mxu0
    %v1292 = vadd.f32 %v1194, %v1291
    %1293 = vmatmul.f32.gmra.mxu0 %v1230
    %v1294 = vpop.f32.mrf.mxu0
    %v1295 = vadd.f32 %v1194, %v1294
    %1296 = vmatmul.f32.gmra.mxu0 %v1233
    %v1297 = vpop.f32.mrf.mxu0
    %v1298 = vadd.f32 %v1194, %v1297
    %1299 = vmatmul.f32.gmra.mxu0 %v1236
    %v1300 = vpop.f32.mrf.mxu0
    %v1301 = vadd.f32 %v1194, %v1300
    %1302 = vmatmul.f32.gmra.mxu0 %v1239
    %v1303 = vpop.f32.mrf.mxu0
    %v1304 = vadd.f32 %v1194, %v1303
    %1305 = vmatmul.f32.gmra.mxu0 %v1242
    %v1306 = vpop.f32.mrf.mxu0
    %v1307 = vadd.f32 %v1194, %v1306
    %1308 = vdwg.mxu0
    %s1309 = scalar_lea.vmem %s7, 4
    %v1310 = vld [vmem:[%s1309] sm:$0x3]
    %s1311 = scalar_lea.vmem %s8, 2
    %v1312 = vld [vmem:[%s1311] sm:$0x1]
    %s1313 = scalar_lea.vmem %s9, 128
    %v1314 = vld [vmem:[%s1313] sm:$0xff]
    %v1315 = vld [vmem:[%s1313 + $0x8] sm:$0xff]
    %v1316 = vld [vmem:[%s1313 + $0x10] sm:$0xff]
    %v1317 = vld [vmem:[%s1313 + $0x18] sm:$0xff]
    %v1318 = vld [vmem:[%s1313 + $0x20] sm:$0xff]
    %v1319 = vld [vmem:[%s1313 + $0x28] sm:$0xff]
    %v1320 = vld [vmem:[%s1313 + $0x30] sm:$0xff]
    %v1321 = vld [vmem:[%s1313 + $0x38] sm:$0xff]
    %s1322 = scalar_lea.vmem %s10, 2
    %v1323 = vld [vmem:[%s1322] sm:$0x1]
    %v1325 = vsel %vm237, %v1310, 0
    %1327 = vmatpush.msra.mxu0 0.0
    %1328 = vmatpush.msra.mxu0 0.0
    %1329 = vmatpush.msra.mxu0 0.0
    %1330 = vmatpush.msra.mxu0 0.0
    %1331 = vmatpush.msra.mxu0 0.0
    %1332 = vmatpush.msra.mxu0 0.0
    %1333 = vmatpush.msra.mxu0 0.0
    %1334 = vmatpush.msra.mxu0 0.0
    %1335 = vmatpush.msra.mxu0 0.0
    %1336 = vmatpush.msra.mxu0 0.0
    %1337 = vmatpush.msra.mxu0 0.0
    %1338 = vmatpush.msra.mxu0 0.0
    %1339 = vmatpush.msra.mxu0 0.0
    %1340 = vmatpush.msra.mxu0 0.0
    %1341 = vmatpush.msra.mxu0 0.0
    %1342 = vmatpush.msra.mxu0 %v1325
    %1343 = vmatmul.f32.gmra.mxu0 %v190
    %v1344 = vpop.f32.mrf.mxu0
    %v1345 = vadd.f32 0.0, %v1344
    %1346 = vmatmul.f32.gmra.mxu0 %v193
    %v1347 = vpop.f32.mrf.mxu0
    %v1348 = vadd.f32 0.0, %v1347
    %1349 = vmatmul.f32.gmra.mxu0 %v196
    %v1350 = vpop.f32.mrf.mxu0
    %v1351 = vadd.f32 0.0, %v1350
    %1352 = vmatmul.f32.gmra.mxu0 %v199
    %v1353 = vpop.f32.mrf.mxu0
    %v1354 = vadd.f32 0.0, %v1353
    %1355 = vmatmul.f32.gmra.mxu0 %v202
    %v1356 = vpop.f32.mrf.mxu0
    %v1357 = vadd.f32 0.0, %v1356
    %1358 = vmatmul.f32.gmra.mxu0 %v205
    %v1359 = vpop.f32.mrf.mxu0
    %v1360 = vadd.f32 0.0, %v1359
    %1361 = vmatmul.f32.gmra.mxu0 %v208
    %v1362 = vpop.f32.mrf.mxu0
    %v1363 = vadd.f32 0.0, %v1362
    %1364 = vmatmul.f32.gmra.mxu0 %v211
    %v1365 = vpop.f32.mrf.mxu0
    %v1366 = vadd.f32 0.0, %v1365
    %1367 = vmatmul.f32.gmra.mxu0 %v214
    %v1368 = vpop.f32.mrf.mxu0
    %v1369 = vadd.f32 0.0, %v1368
    %1370 = vmatmul.f32.gmra.mxu0 %v217
    %v1371 = vpop.f32.mrf.mxu0
    %v1372 = vadd.f32 0.0, %v1371
    %1373 = vmatmul.f32.gmra.mxu0 %v220
    %v1374 = vpop.f32.mrf.mxu0
    %v1375 = vadd.f32 0.0, %v1374
    %1376 = vmatmul.f32.gmra.mxu0 %v223
    %v1377 = vpop.f32.mrf.mxu0
    %v1378 = vadd.f32 0.0, %v1377
    %1379 = vmatmul.f32.gmra.mxu0 %v226
    %v1380 = vpop.f32.mrf.mxu0
    %v1381 = vadd.f32 0.0, %v1380
    %1382 = vmatmul.f32.gmra.mxu0 %v229
    %v1383 = vpop.f32.mrf.mxu0
    %v1384 = vadd.f32 0.0, %v1383
    %1385 = vmatmul.f32.gmra.mxu0 %v232
    %v1386 = vpop.f32.mrf.mxu0
    %v1387 = vadd.f32 0.0, %v1386
    %1388 = vmatmul.f32.gmra.mxu0 %v235
    %v1389 = vpop.f32.mrf.mxu0
    %v1390 = vadd.f32 0.0, %v1389
    %1391 = vdwg.mxu0
    %v1393 = vperm.slane %v1312, 0
    %1395 = vmatpush.msra.mxu0 %v1390
    %1396 = vmatpush.msra.mxu0 %v1387
    %1397 = vmatpush.msra.mxu0 %v1384
    %1398 = vmatpush.msra.mxu0 %v1381
    %1399 = vmatpush.msra.mxu0 %v1378
    %1400 = vmatpush.msra.mxu0 %v1375
    %1401 = vmatpush.msra.mxu0 %v1372
    %1402 = vmatpush.msra.mxu0 %v1369
    %1403 = vmatpush.msra.mxu0 %v1366
    %1404 = vmatpush.msra.mxu0 %v1363
    %1405 = vmatpush.msra.mxu0 %v1360
    %1406 = vmatpush.msra.mxu0 %v1357
    %1407 = vmatpush.msra.mxu0 %v1354
    %1408 = vmatpush.msra.mxu0 %v1351
    %1409 = vmatpush.msra.mxu0 %v1348
    %1410 = vmatpush.msra.mxu0 %v1345
    %1411 = vmatmul.f32.gmra.mxu0 %v93
    %v1412 = vpop.f32.mrf.mxu0
    %v1413 = vadd.f32 %v1393, %v1412
    %1414 = vmatmul.f32.gmra.mxu0 %v94
    %v1415 = vpop.f32.mrf.mxu0
    %v1416 = vadd.f32 %v1393, %v1415
    %1417 = vmatmul.f32.gmra.mxu0 %v95
    %v1418 = vpop.f32.mrf.mxu0
    %v1419 = vadd.f32 %v1393, %v1418
    %1420 = vmatmul.f32.gmra.mxu0 %v96
    %v1421 = vpop.f32.mrf.mxu0
    %v1422 = vadd.f32 %v1393, %v1421
    %1423 = vmatmul.f32.gmra.mxu0 %v97
    %v1424 = vpop.f32.mrf.mxu0
    %v1425 = vadd.f32 %v1393, %v1424
    %1426 = vmatmul.f32.gmra.mxu0 %v98
    %v1427 = vpop.f32.mrf.mxu0
    %v1428 = vadd.f32 %v1393, %v1427
    %1429 = vmatmul.f32.gmra.mxu0 %v99
    %v1430 = vpop.f32.mrf.mxu0
    %v1431 = vadd.f32 %v1393, %v1430
    %1432 = vmatmul.f32.gmra.mxu0 %v100
    %v1433 = vpop.f32.mrf.mxu0
    %v1434 = vadd.f32 %v1393, %v1433
    %1435 = vmatmul.f32.gmra.mxu0 %v101
    %v1436 = vpop.f32.mrf.mxu0
    %v1437 = vadd.f32 %v1393, %v1436
    %1438 = vmatmul.f32.gmra.mxu0 %v102
    %v1439 = vpop.f32.mrf.mxu0
    %v1440 = vadd.f32 %v1393, %v1439
    %1441 = vmatmul.f32.gmra.mxu0 %v103
    %v1442 = vpop.f32.mrf.mxu0
    %v1443 = vadd.f32 %v1393, %v1442
    %1444 = vmatmul.f32.gmra.mxu0 %v104
    %v1445 = vpop.f32.mrf.mxu0
    %v1446 = vadd.f32 %v1393, %v1445
    %1447 = vmatmul.f32.gmra.mxu0 %v105
    %v1448 = vpop.f32.mrf.mxu0
    %v1449 = vadd.f32 %v1393, %v1448
    %1450 = vmatmul.f32.gmra.mxu0 %v106
    %v1451 = vpop.f32.mrf.mxu0
    %v1452 = vadd.f32 %v1393, %v1451
    %1453 = vmatmul.f32.gmra.mxu0 %v107
    %v1454 = vpop.f32.mrf.mxu0
    %v1455 = vadd.f32 %v1393, %v1454
    %1456 = vmatmul.f32.gmra.mxu0 %v108
    %v1457 = vpop.f32.mrf.mxu0
    %v1458 = vadd.f32 %v1393, %v1457
    %1459 = vdwg.mxu0
    %v1460 = vmax.f32 %v1413, 0.0
    %v1461 = vmax.f32 %v1416, 0.0
    %v1462 = vmax.f32 %v1419, 0.0
    %v1463 = vmax.f32 %v1422, 0.0
    %v1464 = vmax.f32 %v1425, 0.0
    %v1465 = vmax.f32 %v1428, 0.0
    %v1466 = vmax.f32 %v1431, 0.0
    %v1467 = vmax.f32 %v1434, 0.0
    %v1468 = vmax.f32 %v1437, 0.0
    %v1469 = vmax.f32 %v1440, 0.0
    %v1470 = vmax.f32 %v1443, 0.0
    %v1471 = vmax.f32 %v1446, 0.0
    %v1472 = vmax.f32 %v1449, 0.0
    %v1473 = vmax.f32 %v1452, 0.0
    %v1474 = vmax.f32 %v1455, 0.0
    %v1475 = vmax.f32 %v1458, 0.0
    %v1477 = vsel %vm390, %v1262, 0
    %v1480 = vsel %vm390, %v1265, 0
    %v1483 = vsel %vm390, %v1268, 0
    %v1486 = vsel %vm390, %v1271, 0
    %v1489 = vsel %vm390, %v1274, 0
    %v1492 = vsel %vm390, %v1277, 0
    %v1495 = vsel %vm390, %v1280, 0
    %v1498 = vsel %vm390, %v1283, 0
    %v1501 = vsel %vm390, %v1286, 0
    %v1504 = vsel %vm390, %v1289, 0
    %v1507 = vsel %vm390, %v1292, 0
    %v1510 = vsel %vm390, %v1295, 0
    %v1513 = vsel %vm390, %v1298, 0
    %v1516 = vsel %vm390, %v1301, 0
    %v1519 = vsel %vm390, %v1304, 0
    %v1522 = vsel %vm390, %v1307, 0
    %1524 = vmatpush.msra.mxu0 0.0
    %1525 = vmatpush.msra.mxu0 0.0
    %1526 = vmatpush.msra.mxu0 0.0
    %1527 = vmatpush.msra.mxu0 0.0
    %1528 = vmatpush.msra.mxu0 0.0
    %1529 = vmatpush.msra.mxu0 0.0
    %1530 = vmatpush.msra.mxu0 0.0
    %1531 = vmatpush.msra.mxu0 0.0
    %1532 = vmatpush.msra.mxu0 0.0
    %1533 = vmatpush.msra.mxu0 0.0
    %1534 = vmatpush.msra.mxu0 0.0
    %1535 = vmatpush.msra.mxu0 0.0
    %1536 = vmatpush.msra.mxu0 0.0
    %1537 = vmatpush.msra.mxu0 0.0
    %1538 = vmatpush.msra.mxu0 %v144
    %1539 = vmatpush.msra.mxu0 %v143
    %1540 = vmatmul.f32.gmra.mxu0 %v1477
    %v1541 = vpop.f32.mrf.mxu0
    %v1542 = vadd.f32 0.0, %v1541
    %1543 = vmatmul.f32.gmra.mxu0 %v1480
    %v1544 = vpop.f32.mrf.mxu0
    %v1545 = vadd.f32 0.0, %v1544
    %1546 = vmatmul.f32.gmra.mxu0 %v1483
    %v1547 = vpop.f32.mrf.mxu0
    %v1548 = vadd.f32 0.0, %v1547
    %1549 = vmatmul.f32.gmra.mxu0 %v1486
    %v1550 = vpop.f32.mrf.mxu0
    %v1551 = vadd.f32 0.0, %v1550
    %1552 = vmatmul.f32.gmra.mxu0 %v1489
    %v1553 = vpop.f32.mrf.mxu0
    %v1554 = vadd.f32 0.0, %v1553
    %1555 = vmatmul.f32.gmra.mxu0 %v1492
    %v1556 = vpop.f32.mrf.mxu0
    %v1557 = vadd.f32 0.0, %v1556
    %1558 = vmatmul.f32.gmra.mxu0 %v1495
    %v1559 = vpop.f32.mrf.mxu0
    %v1560 = vadd.f32 0.0, %v1559
    %1561 = vmatmul.f32.gmra.mxu0 %v1498
    %v1562 = vpop.f32.mrf.mxu0
    %v1563 = vadd.f32 0.0, %v1562
    %1564 = vmatmul.f32.gmra.mxu0 %v1501
    %v1565 = vpop.f32.mrf.mxu0
    %v1566 = vadd.f32 0.0, %v1565
    %1567 = vmatmul.f32.gmra.mxu0 %v1504
    %v1568 = vpop.f32.mrf.mxu0
    %v1569 = vadd.f32 0.0, %v1568
    %1570 = vmatmul.f32.gmra.mxu0 %v1507
    %v1571 = vpop.f32.mrf.mxu0
    %v1572 = vadd.f32 0.0, %v1571
    %1573 = vmatmul.f32.gmra.mxu0 %v1510
    %v1574 = vpop.f32.mrf.mxu0
    %v1575 = vadd.f32 0.0, %v1574
    %1576 = vmatmul.f32.gmra.mxu0 %v1513
    %v1577 = vpop.f32.mrf.mxu0
    %v1578 = vadd.f32 0.0, %v1577
    %1579 = vmatmul.f32.gmra.mxu0 %v1516
    %v1580 = vpop.f32.mrf.mxu0
    %v1581 = vadd.f32 0.0, %v1580
    %1582 = vmatmul.f32.gmra.mxu0 %v1519
    %v1583 = vpop.f32.mrf.mxu0
    %v1584 = vadd.f32 0.0, %v1583
    %1585 = vmatmul.f32.gmra.mxu0 %v1522
    %v1586 = vpop.f32.mrf.mxu0
    %v1587 = vadd.f32 0.0, %v1586
    %1588 = vdwg.mxu0
    %1589 = vmatpush.msra.mxu0 %v1587
    %1590 = vmatpush.msra.mxu0 %v1584
    %1591 = vmatpush.msra.mxu0 %v1581
    %1592 = vmatpush.msra.mxu0 %v1578
    %1593 = vmatpush.msra.mxu0 %v1575
    %1594 = vmatpush.msra.mxu0 %v1572
    %1595 = vmatpush.msra.mxu0 %v1569
    %1596 = vmatpush.msra.mxu0 %v1566
    %1597 = vmatpush.msra.mxu0 %v1563
    %1598 = vmatpush.msra.mxu0 %v1560
    %1599 = vmatpush.msra.mxu0 %v1557
    %1600 = vmatpush.msra.mxu0 %v1554
    %1601 = vmatpush.msra.mxu0 %v1551
    %1602 = vmatpush.msra.mxu0 %v1548
    %1603 = vmatpush.msra.mxu0 %v1545
    %1604 = vmatpush.msra.mxu0 %v1542
    %1605 = vmatmul.f32.gmra.mxu0 %v61
    %v1606 = vpop.f32.mrf.mxu0
    %v1607 = vadd.f32 0.0, %v1606
    %1608 = vmatmul.f32.gmra.mxu0 %v62
    %v1609 = vpop.f32.mrf.mxu0
    %v1610 = vadd.f32 0.0, %v1609
    %1611 = vmatmul.f32.gmra.mxu0 %v63
    %v1612 = vpop.f32.mrf.mxu0
    %v1613 = vadd.f32 0.0, %v1612
    %1614 = vmatmul.f32.gmra.mxu0 %v64
    %v1615 = vpop.f32.mrf.mxu0
    %v1616 = vadd.f32 0.0, %v1615
    %1617 = vmatmul.f32.gmra.mxu0 %v65
    %v1618 = vpop.f32.mrf.mxu0
    %v1619 = vadd.f32 0.0, %v1618
    %1620 = vmatmul.f32.gmra.mxu0 %v66
    %v1621 = vpop.f32.mrf.mxu0
    %v1622 = vadd.f32 0.0, %v1621
    %1623 = vmatmul.f32.gmra.mxu0 %v67
    %v1624 = vpop.f32.mrf.mxu0
    %v1625 = vadd.f32 0.0, %v1624
    %1626 = vmatmul.f32.gmra.mxu0 %v68
    %v1627 = vpop.f32.mrf.mxu0
    %v1628 = vadd.f32 0.0, %v1627
    %1629 = vmatmul.f32.gmra.mxu0 %v69
    %v1630 = vpop.f32.mrf.mxu0
    %v1631 = vadd.f32 0.0, %v1630
    %1632 = vmatmul.f32.gmra.mxu0 %v70
    %v1633 = vpop.f32.mrf.mxu0
    %v1634 = vadd.f32 0.0, %v1633
    %1635 = vmatmul.f32.gmra.mxu0 %v71
    %v1636 = vpop.f32.mrf.mxu0
    %v1637 = vadd.f32 0.0, %v1636
    %1638 = vmatmul.f32.gmra.mxu0 %v72
    %v1639 = vpop.f32.mrf.mxu0
    %v1640 = vadd.f32 0.0, %v1639
    %1641 = vmatmul.f32.gmra.mxu0 %v73
    %v1642 = vpop.f32.mrf.mxu0
    %v1643 = vadd.f32 0.0, %v1642
    %1644 = vmatmul.f32.gmra.mxu0 %v74
    %v1645 = vpop.f32.mrf.mxu0
    %v1646 = vadd.f32 0.0, %v1645
    %1647 = vmatmul.f32.gmra.mxu0 %v75
    %v1648 = vpop.f32.mrf.mxu0
    %v1649 = vadd.f32 0.0, %v1648
    %1650 = vmatmul.f32.gmra.mxu0 %v76
    %v1651 = vpop.f32.mrf.mxu0
    %v1652 = vadd.f32 0.0, %v1651
    %1653 = vdwg.mxu0
    %v1654 = vmul.f32 %v1460, %v1607
    %v1655 = vmul.f32 %v1461, %v1610
    %v1656 = vmul.f32 %v1462, %v1613
    %v1657 = vmul.f32 %v1463, %v1616
    %v1658 = vmul.f32 %v1464, %v1619
    %v1659 = vmul.f32 %v1465, %v1622
    %v1660 = vmul.f32 %v1466, %v1625
    %v1661 = vmul.f32 %v1467, %v1628
    %v1662 = vmul.f32 %v1468, %v1631
    %v1663 = vmul.f32 %v1469, %v1634
    %v1664 = vmul.f32 %v1470, %v1637
    %v1665 = vmul.f32 %v1471, %v1640
    %v1666 = vmul.f32 %v1472, %v1643
    %v1667 = vmul.f32 %v1473, %v1646
    %v1668 = vmul.f32 %v1474, %v1649
    %v1669 = vmul.f32 %v1475, %v1652
    %1670 = vmatpush.msra.mxu0 %v1669
    %1671 = vmatpush.msra.mxu0 %v1668
    %1672 = vmatpush.msra.mxu0 %v1667
    %1673 = vmatpush.msra.mxu0 %v1666
    %1674 = vmatpush.msra.mxu0 %v1665
    %1675 = vmatpush.msra.mxu0 %v1664
    %1676 = vmatpush.msra.mxu0 %v1663
    %1677 = vmatpush.msra.mxu0 %v1662
    %1678 = vmatpush.msra.mxu0 %v1661
    %1679 = vmatpush.msra.mxu0 %v1660
    %1680 = vmatpush.msra.mxu0 %v1659
    %1681 = vmatpush.msra.mxu0 %v1658
    %1682 = vmatpush.msra.mxu0 %v1657
    %1683 = vmatpush.msra.mxu0 %v1656
    %1684 = vmatpush.msra.mxu0 %v1655
    %1685 = vmatpush.msra.mxu0 %v1654
    %1686 = vmatmul.f32.gmra.mxu0 %v125
    %v1687 = vpop.f32.mrf.mxu0
    %v1688 = vadd.f32 0.0, %v1687
    %1689 = vmatmul.f32.gmra.mxu0 %v126
    %v1690 = vpop.f32.mrf.mxu0
    %v1691 = vadd.f32 0.0, %v1690
    %1692 = vmatmul.f32.gmra.mxu0 %v127
    %v1693 = vpop.f32.mrf.mxu0
    %v1694 = vadd.f32 0.0, %v1693
    %1695 = vmatmul.f32.gmra.mxu0 %v128
    %v1696 = vpop.f32.mrf.mxu0
    %v1697 = vadd.f32 0.0, %v1696
    %1698 = vmatmul.f32.gmra.mxu0 %v129
    %v1699 = vpop.f32.mrf.mxu0
    %v1700 = vadd.f32 0.0, %v1699
    %1701 = vmatmul.f32.gmra.mxu0 %v130
    %v1702 = vpop.f32.mrf.mxu0
    %v1703 = vadd.f32 0.0, %v1702
    %1704 = vmatmul.f32.gmra.mxu0 %v131
    %v1705 = vpop.f32.mrf.mxu0
    %v1706 = vadd.f32 0.0, %v1705
    %1707 = vmatmul.f32.gmra.mxu0 %v132
    %v1708 = vpop.f32.mrf.mxu0
    %v1709 = vadd.f32 0.0, %v1708
    %1710 = vmatmul.f32.gmra.mxu0 %v133
    %v1711 = vpop.f32.mrf.mxu0
    %v1712 = vadd.f32 0.0, %v1711
    %1713 = vmatmul.f32.gmra.mxu0 %v134
    %v1714 = vpop.f32.mrf.mxu0
    %v1715 = vadd.f32 0.0, %v1714
    %1716 = vmatmul.f32.gmra.mxu0 %v135
    %v1717 = vpop.f32.mrf.mxu0
    %v1718 = vadd.f32 0.0, %v1717
    %1719 = vmatmul.f32.gmra.mxu0 %v136
    %v1720 = vpop.f32.mrf.mxu0
    %v1721 = vadd.f32 0.0, %v1720
    %1722 = vmatmul.f32.gmra.mxu0 %v137
    %v1723 = vpop.f32.mrf.mxu0
    %v1724 = vadd.f32 0.0, %v1723
    %1725 = vmatmul.f32.gmra.mxu0 %v138
    %v1726 = vpop.f32.mrf.mxu0
    %v1727 = vadd.f32 0.0, %v1726
    %1728 = vmatmul.f32.gmra.mxu0 %v139
    %v1729 = vpop.f32.mrf.mxu0
    %v1730 = vadd.f32 0.0, %v1729
    %1731 = vmatmul.f32.gmra.mxu0 %v140
    %v1732 = vpop.f32.mrf.mxu0
    %v1733 = vadd.f32 0.0, %v1732
    %1734 = vdwg.mxu0
    %v1736 = vperm.slane %v1323, 0
    %v1739 = vsel %vm653, %v1688, 0
    %v1742 = vsel %vm653, %v1691, 0
    %v1745 = vsel %vm653, %v1694, 0
    %v1748 = vsel %vm653, %v1697, 0
    %v1751 = vsel %vm653, %v1700, 0
    %v1754 = vsel %vm653, %v1703, 0
    %v1757 = vsel %vm653, %v1706, 0
    %v1760 = vsel %vm653, %v1709, 0
    %v1763 = vsel %vm653, %v1712, 0
    %v1766 = vsel %vm653, %v1715, 0
    %v1769 = vsel %vm653, %v1718, 0
    %v1772 = vsel %vm653, %v1721, 0
    %v1775 = vsel %vm653, %v1724, 0
    %v1778 = vsel %vm653, %v1727, 0
    %v1781 = vsel %vm653, %v1730, 0
    %v1784 = vsel %vm653, %v1733, 0
    %1786 = vmatpush.msra.mxu0 0.0
    %1787 = vmatpush.msra.mxu0 0.0
    %1788 = vmatpush.msra.mxu0 0.0
    %1789 = vmatpush.msra.mxu0 0.0
    %1790 = vmatpush.msra.mxu0 0.0
    %1791 = vmatpush.msra.mxu0 0.0
    %1792 = vmatpush.msra.mxu0 0.0
    %1793 = vmatpush.msra.mxu0 0.0
    %1794 = vmatpush.msra.mxu0 %v1321
    %1795 = vmatpush.msra.mxu0 %v1320
    %1796 = vmatpush.msra.mxu0 %v1319
    %1797 = vmatpush.msra.mxu0 %v1318
    %1798 = vmatpush.msra.mxu0 %v1317
    %1799 = vmatpush.msra.mxu0 %v1316
    %1800 = vmatpush.msra.mxu0 %v1315
    %1801 = vmatpush.msra.mxu0 %v1314
    %1802 = vmatmul.f32.gmra.mxu0 %v1739
    %v1803 = vpop.f32.mrf.mxu0
    %v1804 = vadd.f32 %v1736, %v1803
    %1805 = vmatmul.f32.gmra.mxu0 %v1742
    %v1806 = vpop.f32.mrf.mxu0
    %v1807 = vadd.f32 %v1736, %v1806
    %1808 = vmatmul.f32.gmra.mxu0 %v1745
    %v1809 = vpop.f32.mrf.mxu0
    %v1810 = vadd.f32 %v1736, %v1809
    %1811 = vmatmul.f32.gmra.mxu0 %v1748
    %v1812 = vpop.f32.mrf.mxu0
    %v1813 = vadd.f32 %v1736, %v1812
    %1814 = vmatmul.f32.gmra.mxu0 %v1751
    %v1815 = vpop.f32.mrf.mxu0
    %v1816 = vadd.f32 %v1736, %v1815
    %1817 = vmatmul.f32.gmra.mxu0 %v1754
    %v1818 = vpop.f32.mrf.mxu0
    %v1819 = vadd.f32 %v1736, %v1818
    %1820 = vmatmul.f32.gmra.mxu0 %v1757
    %v1821 = vpop.f32.mrf.mxu0
    %v1822 = vadd.f32 %v1736, %v1821
    %1823 = vmatmul.f32.gmra.mxu0 %v1760
    %v1824 = vpop.f32.mrf.mxu0
    %v1825 = vadd.f32 %v1736, %v1824
    %1826 = vmatmul.f32.gmra.mxu0 %v1763
    %v1827 = vpop.f32.mrf.mxu0
    %v1828 = vadd.f32 %v1736, %v1827
    %1829 = vmatmul.f32.gmra.mxu0 %v1766
    %v1830 = vpop.f32.mrf.mxu0
    %v1831 = vadd.f32 %v1736, %v1830
    %1832 = vmatmul.f32.gmra.mxu0 %v1769
    %v1833 = vpop.f32.mrf.mxu0
    %v1834 = vadd.f32 %v1736, %v1833
    %1835 = vmatmul.f32.gmra.mxu0 %v1772
    %v1836 = vpop.f32.mrf.mxu0
    %v1837 = vadd.f32 %v1736, %v1836
    %1838 = vmatmul.f32.gmra.mxu0 %v1775
    %v1839 = vpop.f32.mrf.mxu0
    %v1840 = vadd.f32 %v1736, %v1839
    %1841 = vmatmul.f32.gmra.mxu0 %v1778
    %v1842 = vpop.f32.mrf.mxu0
    %v1843 = vadd.f32 %v1736, %v1842
    %1844 = vmatmul.f32.gmra.mxu0 %v1781
    %v1845 = vpop.f32.mrf.mxu0
    %v1846 = vadd.f32 %v1736, %v1845
    %1847 = vmatmul.f32.gmra.mxu0 %v1784
    %v1848 = vpop.f32.mrf.mxu0
    %v1849 = vadd.f32 %v1736, %v1848
    %1850 = vdwg.mxu0
    %v1851 = vld [vmem:[%s6] sm:$0x3]
    %1852 = vmatpush.msra.mxu0 %v1849
    %1853 = vmatpush.msra.mxu0 %v1846
    %1854 = vmatpush.msra.mxu0 %v1843
    %1855 = vmatpush.msra.mxu0 %v1840
    %1856 = vmatpush.msra.mxu0 %v1837
    %1857 = vmatpush.msra.mxu0 %v1834
    %1858 = vmatpush.msra.mxu0 %v1831
    %1859 = vmatpush.msra.mxu0 %v1828
    %1860 = vmatpush.msra.mxu0 %v1825
    %1861 = vmatpush.msra.mxu0 %v1822
    %1862 = vmatpush.msra.mxu0 %v1819
    %1863 = vmatpush.msra.mxu0 %v1816
    %1864 = vmatpush.msra.mxu0 %v1813
    %1865 = vmatpush.msra.mxu0 %v1810
    %1866 = vmatpush.msra.mxu0 %v1807
    %1867 = vmatpush.msra.mxu0 %v1804
    %1868 = vmatmul.f32.gmra.mxu0 %v1851
    %v1869 = vpop.f32.mrf.mxu0
    %v1870 = vadd.f32 0.0, %v1869
    %1871 = vdwg.mxu0
    %v1872 = vld [vmem:[%s11] sm:$0xff]
    %v1873 = vld [vmem:[%s11 + $0x8] sm:$0xff]
    %v1874 = vld [vmem:[%s12] sm:$0x1]
    %v1876 = vperm.slane %v1874, 0
    %v1879 = vsel %vm390, %v1870, 0
    %1881 = vmatpush.msra.mxu0 0.0
    %1882 = vmatpush.msra.mxu0 0.0
    %1883 = vmatpush.msra.mxu0 0.0
    %1884 = vmatpush.msra.mxu0 0.0
    %1885 = vmatpush.msra.mxu0 0.0
    %1886 = vmatpush.msra.mxu0 0.0
    %1887 = vmatpush.msra.mxu0 0.0
    %1888 = vmatpush.msra.mxu0 0.0
    %1889 = vmatpush.msra.mxu0 0.0
    %1890 = vmatpush.msra.mxu0 0.0
    %1891 = vmatpush.msra.mxu0 0.0
    %1892 = vmatpush.msra.mxu0 0.0
    %1893 = vmatpush.msra.mxu0 0.0
    %1894 = vmatpush.msra.mxu0 0.0
    %1895 = vmatpush.msra.mxu0 %v1873
    %1896 = vmatpush.msra.mxu0 %v1872
    %1897 = vmatmul.f32.gmra.mxu0 %v1879
    %v1898 = vpop.f32.mrf.mxu0
    %v1899 = vadd.f32 %v1876, %v1898
    %1900 = vdwg.mxu0
    %vm1901 = vcmask 25600
    %v1902 = vsel %vm1901, %v1899, -inf
    %v1903 = vrot.slane %v1902, 4
    %v1904 = vmax.f32 %v1902, %v1903
    %v1905 = vrot.slane %v1904, 2
    %v1906 = vmax.f32 %v1904, %v1905
    %v1907 = vrot.slane %v1906, 1
    %v1908 = vmax.f32 %v1906, %v1907
    %v1909 = vsub.f32 %v1899, %v1908
    %v1910 = vmul.f32 %v1909, 1.442695
    %v1911 = vpow.pop %v1910
    %v1912 = vsel %vm1901, %v1911, 0.0
    %v1913 = vrot.slane %v1912, 4
    %v1914 = vadd.f32 %v1912, %v1913
    %v1915 = vrot.slane %v1914, 2
    %v1916 = vadd.f32 %v1914, %v1915
    %v1917 = vrot.slane %v1916, 1
    %v1918 = vadd.f32 %v1916, %v1917
    %v1919 = vlog2.pop %v1918
    %v1920 = vmul.f32 %v1919, 0.6931472
    %v1921 = vsub.f32 %v1909, %v1920
    %1922 = vst.msk [vmem:[#allocation2] sm:$0x3] %vm1901, %v1921
    // Predicated region
    $region54: #{sgcn_forward.1} parent=1 // pred_check
      _
    $region55: #{sgcn_forward.1} parent=1 // pred_check_branch
      %1924 = sbr.rel (0) target = $region57
    $region56: #{sgcn_forward.1} parent=1 // pred_region
      %1926 = vsyncadd [#allocation3], 0
      %s1928 = sshll.u32 [#allocation2], 4
      %s1929 = int_to_ptr.vmem [resolvable:$true] %s1928
      %s1930 = sshll.u32 %s13, 4
      %s1931 = int_to_ptr.hbm [resolvable:$true] %s1930
      %1933 = dma.vmem_to_hbm [thread:$0]  %s1929, 32, %s1931, [#allocation3]
    $region57: #{sgcn_forward.1} parent=1 // pred_fallthru
      _
    // Predicated region
    $region58: #{sgcn_forward.1} parent=1 // pred_check
      _
    $region59: #{sgcn_forward.1} parent=1 // pred_check_branch
      %1935 = sbr.rel (0) target = $region61
    $region60: #{sgcn_forward.1} parent=1 // pred_region
      %1937 = dma.done [#allocation3], 32
    $region61: #{sgcn_forward.1} parent=1 // pred_fallthru
      _
    %1938 = vsyncpa [#allocation3], 1

</llo_original>
